<compile_context>
chip_gen: v5e
topology: v5e:2x2
jax: 0.10.0
libtpu: 0.0.40
codegen_flags: <defaults>
</compile_context>

<pallas_src>
import functools

import jax
import jax.numpy as jnp
from jax.experimental import pallas as pl
from jax.experimental.pallas import tpu as pltpu

HIDDEN = 256    # fixed by nn.Linear(256, 256)
EDGE_DIM = 39   # fixed by nn.Linear(256, 39)
EXT_DIM = EDGE_DIM + 1   # edge_w with the folded-in mlp row-sum column


# ----------------------------------------------------------------------------
# Fused kernel: per row-tile it produces three partial sums (lane-dense row)
#   lane 0: sum of BCE(x1, label=1) over valid rows
#   lane 1: sum of BCE(x2, label=0) over valid rows (== sum softplus(x1))
#   lane 2: sum of squared edge-recon error over all valid rows
# ----------------------------------------------------------------------------
def _ggd_fused_kernel(h1_ref,               # VMEM [TM, 256] bf16
                      ew_ref, eb_ref,       # VMEM [256, 40] bf16 / [1, 40] f32
                      ef_ref,               # VMEM [TM, 39] bf16
                      out_ref,              # VMEM [1, 1, 128] f32 partials
                      *, n_rows):
    tm = h1_ref.shape[0]
    row0 = pl.program_id(0) * tm
    row_ids = row0 + jax.lax.broadcasted_iota(jnp.int32, (tm, 1), 0)
    valid = row_ids < n_rows                  # mask padded rows of last tile

    # Single MXU matmul; column 39 holds mlp W.sum(1) so z[:, 39] is the GGD
    # discrimination logit (bias b.sum() folded into eb_ref[0, 39]).
    z = jnp.dot(h1_ref[...], ew_ref[...],
                preferred_element_type=jnp.float32) + eb_ref[...]   # [TM, 40]

    # --- GGD discrimination BCE (both labels from one softplus) ---
    x1 = z[:, EDGE_DIM:EDGE_DIM + 1]                                 # [TM, 1]
    sp = jnp.maximum(x1, 0.0) + jnp.log1p(jnp.exp(-jnp.abs(x1)))     # softplus
    zero = jnp.zeros_like(sp)
    bce_neg = jnp.sum(jnp.where(valid, sp, zero))        # sum BCE(x2, 0) via perm. identity
    bce_pos = jnp.sum(jnp.where(valid, sp - x1, zero))   # sum BCE(x1, 1)

    # --- hybrid edge-feature reconstruction (h_e == h_1, shared stream) ---
    recon = 0.5 * jnp.tanh(0.5 * z[:, :EDGE_DIM]) + 0.5   # exact sigmoid, 1 EUP push
    sq = (recon - ef_ref[...].astype(jnp.float32)) ** 2   # [TM, 39]
    row_sq = jnp.where(valid, jnp.sum(sq, axis=1, keepdims=True), zero)
    sq_total = jnp.sum(row_sq)

    # lane-dense partial-sum row (single unmasked 128-lane store)
    lane = jax.lax.broadcasted_iota(jnp.int32, (1, 1, 128), 2)
    out_ref[...] = (jnp.where(lane == 0, bce_pos, 0.0)
                    + jnp.where(lane == 1, bce_neg, 0.0)
                    + jnp.where(lane == 2, sq_total, 0.0))


def ggd_fused_partials(h1_bf16, edge_w_ext, edge_b_ext, e_feats_bf16, *, tm=2048):
    """Runs the fused kernel; returns [bce_pos_sum, bce_neg_sum, sq_total]."""
    n = h1_bf16.shape[0]
    num_tiles = pl.cdiv(n, tm)

    grid_spec = pltpu.PrefetchScalarGridSpec(
        num_scalar_prefetch=0,
        grid=(num_tiles,),
        in_specs=[
            pl.BlockSpec((tm, HIDDEN), lambda i: (i, 0)),        # h1 / h_e (bf16)
            pl.BlockSpec((HIDDEN, EXT_DIM), lambda i: (0, 0)),   # [edge W | wsum] (bf16)
            pl.BlockSpec((1, EXT_DIM), lambda i: (0, 0)),        # [edge b | bsum] (f32)
            pl.BlockSpec((tm, EDGE_DIM), lambda i: (i, 0)),      # edge feats (bf16)
        ],
        out_specs=pl.BlockSpec((1, 1, 128), lambda i: (i, 0, 0)),
    )
    partials = pl.pallas_call(
        functools.partial(_ggd_fused_kernel, n_rows=n),
        out_shape=jax.ShapeDtypeStruct((num_tiles, 1, 128), jnp.float32),
        grid_spec=grid_spec,
        compiler_params=pltpu.CompilerParams(
            dimension_semantics=("parallel",),
            # Well under every generation's physical VMEM (64 MiB/TC on v7x)
            # while leaving headroom for tm up to ~8192 double-buffered.
            vmem_limit_bytes=48 * 1024 * 1024),
    )(h1_bf16, edge_w_ext, edge_b_ext, e_feats_bf16)
    return jnp.sum(partials[:, 0, :3], axis=0)


# ----------------------------------------------------------------------------
# Synthetic deterministic "encoder" + augmentation glue (plain JAX).
# TODO(synk): the real GGD wraps an external GNN encoder and DGL graph
# augmentations; a deterministic row-wise linear encoder with row-permutation
# corruption stands in for them.
# ----------------------------------------------------------------------------
def synthetic_encoder(node_feats, w_enc):
    return jnp.tanh(node_feats @ w_enc)              # encoder(...)[1] -> [N, 256]


def ggd_forward(params, node_feats, edge_feats, few_shot_indices,
                use_hybrid=True, tm=2048):
    n = node_feats.shape[0]
    n_fs = int(few_shot_indices.shape[0])

    # Hoisted encoder work.  h_2 = roll(h_1) would be the corrupted stream,
    # but since the synthetic corruption is a pure row permutation ahead of a
    # row-wise encoder, sum_rows BCE(x2, 0) == sum_rows softplus(x1) and h_2 is
    # never materialized nor streamed through the kernel.
    h_1 = synthetic_encoder(node_feats, params["w_enc"])            # [N, 256] f32
    h1b = h_1.astype(jnp.bfloat16)

    # Fold mlp W.sum(1) / b.sum() into an extra column of the edge linear so
    # one MXU matmul serves both loss paths.
    ew_bf = params["edge_w"].astype(jnp.bfloat16)                    # [256, 39]
    wsum_bf = jnp.sum(params["mlp_w"], axis=1).astype(jnp.bfloat16)  # [256]
    ew_ext = jnp.concatenate([ew_bf, wsum_bf[:, None]], axis=1)      # [256, 40] bf16
    edge_b = params["edge_b"].reshape(1, EDGE_DIM).astype(jnp.float32)
    bsum = jnp.sum(params["mlp_b"]).astype(jnp.float32)
    eb_ext = jnp.concatenate([edge_b, bsum.reshape(1, 1)], axis=1)   # [1, 40] f32
    efb = edge_feats.astype(jnp.bfloat16)

    sums = ggd_fused_partials(h1b, ew_ext, eb_ext, efb, tm=tm)

    loss = (sums[0] + sums[1]) / jnp.float32(2 * n)                  # BCEWithLogits mean
    if not use_hybrid:
        return loss

    # Few-shot MSE computed outside the kernel on the n_fs gathered rows, at
    # the SAME bf16 streaming precision so (sq_total - sq_fs) stays consistent.
    h1_fs = h1b[few_shot_indices]                                    # [n_fs, 256] bf16
    ef_fs = efb[few_shot_indices].astype(jnp.float32)                # [n_fs, 39]
    z_fs = jnp.dot(h1_fs, ew_bf, preferred_element_type=jnp.float32) + edge_b
    recon_fs = jax.nn.sigmoid(z_fs)
    sq_fs = jnp.sum((recon_fs - ef_fs) ** 2)

    # zero-denominator guards for empty / full few-shot sets
    l3 = sq_fs / jnp.float32(max(n_fs, 1) * EDGE_DIM)                  # few-shot MSE
    l4 = (sums[2] - sq_fs) / jnp.float32(max(n - n_fs, 1) * EDGE_DIM)  # rest MSE
    return loss + l3 - l4


# ----------------------------------------------------------------------------
# Pure-JAX reference (same bf16 streaming precision; keeps the explicit h_2
# stream and both BCE terms, so it also validates the permutation identity).
# ----------------------------------------------------------------------------
def reference_forward(params, node_feats, edge_feats, few_shot_indices):
    n = node_feats.shape[0]
    n_fs = int(few_shot_indices.shape[0])
    h1 = jnp.tanh(node_feats @ params["w_enc"])
    h2 = jnp.roll(h1, shift=1, axis=0)
    h1 = h1.astype(jnp.bfloat16).astype(jnp.float32)
    h2 = h2.astype(jnp.bfloat16).astype(jnp.float32)
    ew = params["edge_w"].astype(jnp.bfloat16).astype(jnp.float32)
    wsum = jnp.sum(params["mlp_w"], axis=1).astype(jnp.bfloat16).astype(jnp.float32)
    bsum = jnp.sum(params["mlp_b"])
    x1 = h1 @ wsum + bsum
    x2 = h2 @ wsum + bsum
    bce = lambda x, y: jnp.maximum(x, 0.0) - x * y + jnp.log1p(jnp.exp(-jnp.abs(x)))
    loss = (jnp.sum(bce(x1, 1.0)) + jnp.sum(bce(x2, 0.0))) / (2 * n)
    ef = edge_feats.astype(jnp.bfloat16).astype(jnp.float32)
    recon = jax.nn.sigmoid(h1 @ ew + params["edge_b"].reshape(1, EDGE_DIM))
    sq = (recon - ef) ** 2
    m = jnp.zeros((n,), bool).at[few_shot_indices].set(True)
    l3 = jnp.sum(jnp.where(m[:, None], sq, 0.0)) / (n_fs * EDGE_DIM)
    l4 = jnp.sum(jnp.where(m[:, None], 0.0, sq)) / ((n - n_fs) * EDGE_DIM)
    return loss + l3 - l4


# ----------------------------------------------------------------------------
if __name__ == "__main__":
    N = 800        # nodes / edges (not a multiple of the tile -> exercises masking)
    F_IN = 16      # raw node feature dim (synthetic encoder input)
    TM = 256       # small demo tile (4 tiles -> feeds both v7x TCs);
                   # use the 2048 default (v6e: up to 4096-8192) for real graphs

    key = jax.random.PRNGKey(0)
    k = jax.random.split(key, 8)
    params = {
        "w_enc": jax.random.normal(k[0], (F_IN, HIDDEN), jnp.float32) * 0.05,
        "mlp_w": jax.random.normal(k[1], (HIDDEN, HIDDEN), jnp.float32) * 0.02,
        "mlp_b": jax.random.normal(k[2], (1, HIDDEN), jnp.float32) * 0.02,
        "edge_w": jax.random.normal(k[3], (HIDDEN, EDGE_DIM), jnp.float32) * 0.02,
        "edge_b": jax.random.normal(k[4], (1, EDGE_DIM), jnp.float32) * 0.02,
    }
    node_feats = jax.random.normal(k[5], (N, F_IN), jnp.float32)
    edge_feats = jax.random.uniform(k[6], (N, EDGE_DIM), jnp.float32)
    few_shot_indices = jnp.array([0, 3, 5, 77, 431], jnp.int32)

    out = ggd_forward(params, node_feats, edge_feats, few_shot_indices,
                      use_hybrid=True, tm=TM)
    jax.block_until_ready(out)

    ref = reference_forward(params, node_feats, edge_feats, few_shot_indices)
    assert out.shape == () and bool(jnp.isfinite(out))
    assert abs(float(out) - float(ref)) < 1e-2, (float(out), float(ref))
    print("KERNEL_OK")
</pallas_src>

<mosaic_0001>
module attributes {stable_mosaic.version = 11 : i64} {
  func.func @_ggd_fused_kernel(%arg0: i32, %arg1: memref<256x256xbf16, #tpu.memory_space<vmem>>, %arg2: memref<256x40xbf16, #tpu.memory_space<vmem>>, %arg3: memref<1x40xf32, #tpu.memory_space<vmem>>, %arg4: memref<256x39xbf16, #tpu.memory_space<vmem>>, %arg5: memref<1x1x128xf32, #tpu.memory_space<vmem>>) attributes {dimension_semantics = [#tpu.dimension_semantics<parallel>], iteration_bounds = array<i64: 4>, scalar_prefetch = 0 : i64, scratch_operands = 0 : i64, tpu.core_type = #tpu.core_type<tc>, window_params = [{transform_indices = @transform_0, window_bounds = array<i64: 256, 256>}, {pipeline_mode = #tpu.pipeline_mode<synchronous>, transform_indices = @transform_1, window_bounds = array<i64: 256, 40>}, {pipeline_mode = #tpu.pipeline_mode<synchronous>, transform_indices = @transform_2, window_bounds = array<i64: 1, 40>}, {transform_indices = @transform_3, window_bounds = array<i64: 256, 39>}, {transform_indices = @transform_4, window_bounds = array<i64: 1, 1, 128>}]} {
    %c256_i32 = arith.constant 256 : i32
    %0 = arith.muli %arg0, %c256_i32 : i32
    %1 = tpu.iota {dimensions = array<i32: 0>} : vector<256x1xi32>
    %2 = vector.broadcast %0 : i32 to vector<256x1xi32>
    %3 = arith.addi %2, %1 : vector<256x1xi32>
    %c800_i32 = arith.constant 800 : i32
    %4 = vector.broadcast %c800_i32 : i32 to vector<256x1xi32>
    %5 = arith.cmpi slt, %3, %4 : vector<256x1xi32>
    %c0 = arith.constant 0 : index
    %c0_0 = arith.constant 0 : index
    %6 = vector.load %arg1[%c0, %c0_0] : memref<256x256xbf16, #tpu.memory_space<vmem>>, vector<256x256xbf16>
    %c0_1 = arith.constant 0 : index
    %c0_2 = arith.constant 0 : index
    %7 = vector.load %arg2[%c0_1, %c0_2] : memref<256x40xbf16, #tpu.memory_space<vmem>>, vector<256x40xbf16>
    %cst = arith.constant dense<0.000000e+00> : vector<256x40xf32>
    %8 = tpu.matmul %6, %7, %cst {dimension_numbers = #tpu.dot_dimension_numbers<[1], [0], [0], [1], [0, 0, 1, 1], [], []>} : vector<256x256xbf16>, vector<256x40xbf16>, vector<256x40xf32> -> vector<256x40xf32>
    %c0_3 = arith.constant 0 : index
    %c0_4 = arith.constant 0 : index
    %9 = vector.load %arg3[%c0_3, %c0_4] : memref<1x40xf32, #tpu.memory_space<vmem>>, vector<1x40xf32>
    %10 = vector.broadcast %9 : vector<1x40xf32> to vector<256x40xf32>
    %11 = arith.addf %8, %10 : vector<256x40xf32>
    %12 = vector.extract_strided_slice %11 {offsets = [0, 39], sizes = [256, 1], strides = [1, 1]} : vector<256x40xf32> to vector<256x1xf32>
    %cst_5 = arith.constant 0.000000e+00 : f32
    %13 = vector.broadcast %cst_5 : f32 to vector<256x1xf32>
    %14 = arith.maximumf %12, %13 : vector<256x1xf32>
    %15 = math.absf %12 : vector<256x1xf32>
    %cst_6 = arith.constant 0.000000e+00 : f32
    %16 = vector.broadcast %cst_6 : f32 to vector<256x1xf32>
    %17 = arith.subf %16, %15 : vector<256x1xf32>
    %18 = math.exp %17 : vector<256x1xf32>
    %19 = math.log1p %18 : vector<256x1xf32>
    %20 = arith.addf %14, %19 : vector<256x1xf32>
    %cst_7 = arith.constant 0.000000e+00 : f32
    %21 = vector.broadcast %cst_7 : f32 to vector<256x1xf32>
    %22 = arith.select %5, %20, %21 : vector<256x1xi1>, vector<256x1xf32>
    %23 = vector.shape_cast %22 : vector<256x1xf32> to vector<1x256x1xf32>
    %cst_8 = arith.constant dense<0.000000e+00> : vector<1xf32>
    %24 = vector.multi_reduction <add>, %23, %cst_8 [1, 2] : vector<1x256x1xf32> to vector<1xf32>
    %25 = vector.shape_cast %24 : vector<1xf32> to vector<1x1x1xf32>
    %26 = vector.extract %25[0, 0, 0] : f32 from vector<1x1x1xf32>
    %27 = arith.subf %20, %12 : vector<256x1xf32>
    %28 = arith.select %5, %27, %21 : vector<256x1xi1>, vector<256x1xf32>
    %29 = vector.shape_cast %28 : vector<256x1xf32> to vector<1x256x1xf32>
    %cst_9 = arith.constant dense<0.000000e+00> : vector<1xf32>
    %30 = vector.multi_reduction <add>, %29, %cst_9 [1, 2] : vector<1x256x1xf32> to vector<1xf32>
    %31 = vector.shape_cast %30 : vector<1xf32> to vector<1x1x1xf32>
    %32 = vector.extract %31[0, 0, 0] : f32 from vector<1x1x1xf32>
    %33 = vector.extract_strided_slice %11 {offsets = [0, 0], sizes = [256, 39], strides = [1, 1]} : vector<256x40xf32> to vector<256x39xf32>
    %cst_10 = arith.constant 5.000000e-01 : f32
    %34 = vector.broadcast %cst_10 : f32 to vector<256x39xf32>
    %35 = arith.mulf %34, %33 : vector<256x39xf32>
    %36 = math.tanh %35 : vector<256x39xf32>
    %cst_11 = arith.constant 5.000000e-01 : f32
    %37 = vector.broadcast %cst_11 : f32 to vector<256x39xf32>
    %38 = arith.mulf %37, %36 : vector<256x39xf32>
    %cst_12 = arith.constant 5.000000e-01 : f32
    %39 = vector.broadcast %cst_12 : f32 to vector<256x39xf32>
    %40 = arith.addf %38, %39 : vector<256x39xf32>
    %c0_13 = arith.constant 0 : index
    %c0_14 = arith.constant 0 : index
    %41 = vector.load %arg4[%c0_13, %c0_14] : memref<256x39xbf16, #tpu.memory_space<vmem>>, vector<256x39xbf16>
    %42 = arith.extf %41 : vector<256x39xbf16> to vector<256x39xf32>
    %43 = arith.subf %40, %42 : vector<256x39xf32>
    %44 = arith.mulf %43, %43 : vector<256x39xf32>
    %cst_15 = arith.constant dense<0.000000e+00> : vector<256xf32>
    %45 = vector.multi_reduction <add>, %44, %cst_15 [1] : vector<256x39xf32> to vector<256xf32>
    %46 = vector.shape_cast %45 : vector<256xf32> to vector<256x1xf32>
    %47 = arith.select %5, %46, %21 : vector<256x1xi1>, vector<256x1xf32>
    %48 = vector.shape_cast %47 : vector<256x1xf32> to vector<1x256x1xf32>
    %cst_16 = arith.constant dense<0.000000e+00> : vector<1xf32>
    %49 = vector.multi_reduction <add>, %48, %cst_16 [1, 2] : vector<1x256x1xf32> to vector<1xf32>
    %50 = vector.shape_cast %49 : vector<1xf32> to vector<1x1x1xf32>
    %51 = vector.extract %50[0, 0, 0] : f32 from vector<1x1x1xf32>
    %52 = tpu.iota {dimensions = array<i32: 2>} : vector<1x1x128xi32>
    %c0_i32 = arith.constant 0 : i32
    %53 = vector.broadcast %c0_i32 : i32 to vector<1x1x128xi32>
    %54 = arith.cmpi eq, %52, %53 : vector<1x1x128xi32>
    %cst_17 = arith.constant 0.000000e+00 : f32
    %55 = vector.broadcast %32 : f32 to vector<1x1x128xf32>
    %56 = vector.broadcast %cst_17 : f32 to vector<1x1x128xf32>
    %57 = arith.select %54, %55, %56 : vector<1x1x128xi1>, vector<1x1x128xf32>
    %c1_i32 = arith.constant 1 : i32
    %58 = vector.broadcast %c1_i32 : i32 to vector<1x1x128xi32>
    %59 = arith.cmpi eq, %52, %58 : vector<1x1x128xi32>
    %cst_18 = arith.constant 0.000000e+00 : f32
    %60 = vector.broadcast %26 : f32 to vector<1x1x128xf32>
    %61 = vector.broadcast %cst_18 : f32 to vector<1x1x128xf32>
    %62 = arith.select %59, %60, %61 : vector<1x1x128xi1>, vector<1x1x128xf32>
    %63 = arith.addf %57, %62 : vector<1x1x128xf32>
    %c2_i32 = arith.constant 2 : i32
    %64 = vector.broadcast %c2_i32 : i32 to vector<1x1x128xi32>
    %65 = arith.cmpi eq, %52, %64 : vector<1x1x128xi32>
    %cst_19 = arith.constant 0.000000e+00 : f32
    %66 = vector.broadcast %51 : f32 to vector<1x1x128xf32>
    %67 = vector.broadcast %cst_19 : f32 to vector<1x1x128xf32>
    %68 = arith.select %65, %66, %67 : vector<1x1x128xi1>, vector<1x1x128xf32>
    %69 = arith.addf %63, %68 : vector<1x1x128xf32>
    %c0_20 = arith.constant 0 : index
    %c0_21 = arith.constant 0 : index
    %c0_22 = arith.constant 0 : index
    %70 = vector.load %arg5[%c0_20, %c0_21, %c0_22] : memref<1x1x128xf32, #tpu.memory_space<vmem>>, vector<1x1x128xf32>
    tpu.vector_store %arg5[%c0_20, %c0_21, %c0_22], %69 {strides = array<i32>} : memref<1x1x128xf32, #tpu.memory_space<vmem>>, vector<1x1x128xf32>,
    return
  }
  func.func @transform_0(%arg0: i32) -> (i32, i32) {
    %c0_i32 = arith.constant 0 : i32
    %c0_i32_0 = arith.constant 0 : i32
    return %arg0, %c0_i32 : i32, i32
  }
  func.func @transform_1(%arg0: i32) -> (i32, i32) {
    %c0_i32 = arith.constant 0 : i32
    %c0_i32_0 = arith.constant 0 : i32
    %c0_i32_1 = arith.constant 0 : i32
    return %c0_i32, %c0_i32_0 : i32, i32
  }
  func.func @transform_2(%arg0: i32) -> (i32, i32) {
    %c0_i32 = arith.constant 0 : i32
    %c0_i32_0 = arith.constant 0 : i32
    %c0_i32_1 = arith.constant 0 : i32
    return %c0_i32, %c0_i32_0 : i32, i32
  }
  func.func @transform_3(%arg0: i32) -> (i32, i32) {
    %c0_i32 = arith.constant 0 : i32
    %c0_i32_0 = arith.constant 0 : i32
    return %arg0, %c0_i32 : i32, i32
  }
  func.func @transform_4(%arg0: i32) -> (i32, i32, i32) {
    %c0_i32 = arith.constant 0 : i32
    %c0_i32_0 = arith.constant 0 : i32
    %c0_i32_1 = arith.constant 0 : i32
    return %arg0, %c0_i32, %c0_i32_0 : i32, i32, i32
  }
}

</mosaic_0001>

<llo_original>
// kernel: tpu_custom_call.1
$region0: #{tpu_custom_call.1}
  #allocation0 [shape = 'u32[]', space=smem, size = 0x4, offset = 0x4, fixed_abs, tag = 'smem constant byte address 0x4 - core index']
  #allocation1 [shape = 'u32[72,128]{1,0:T(1,128)}', space=vmem, size = 0x9000, scoped, tag = 'internal scratch']
  %s0 = inlined_call_operand.hbm [shape: bf16[800,256], index: 0, kind: input, shape index: {}]
  %s1 = inlined_call_operand.vmem [shape: bf16[256,40], index: 1, kind: input, shape index: {}]
  %s2 = inlined_call_operand.vmem [shape: f32[1,40], index: 2, kind: input, shape index: {}]
  %s3 = inlined_call_operand.vmem [shape: bf16[800,39], index: 3, kind: input, shape index: {}]
  %s4 = inlined_call_operand.hbm [shape: f32[4,1,128], index: 4, kind: output, shape index: {}]
  %s5 = sld [smem:[#allocation0]]
  $region53: #{tpu_custom_call.1} parent=0
    _
  %s7 = ssub.s32 1, %s5
  %s8 = scalar_select 0, %s7, %s5
  $region1: #{tpu_custom_call.1} parent=0
    #allocation2 [shape = 'u8[262144]{0}', space=vmem, size = 0x40000, scoped, tag = 'input window, operand 0']
    #allocation3 [shape = 's32[2]{0}', space=sflag, size = 0x8, scoped, tag = 'scoped memory for tpu_custom_call.1']
    #allocation4 [shape = 's32[2]{0}', space=sflag, size = 0x8, scoped, tag = 'scoped memory for tpu_custom_call.1']
    #allocation5 [shape = 'u8[1024]{0}', space=vmem, size = 0x400, scoped, tag = 'output window, operand 0']
    %9 = vsyncpa [#allocation3], 0
    %s10 = scalar_lea.sflag [#allocation3], 1
    %11 = vsyncpa %s10, 0
    %12 = vsyncpa [#allocation4], 0
    %s13 = scalar_lea.sflag [#allocation4], 1
    %14 = vsyncpa %s13, 0
    loop: start=0, step=1, limit=6
    $region2: #{tpu_custom_call.1} parent=1 // loop_pre_header
      _
    $region3: #{tpu_custom_call.1} parent=1 // loop_header
      %s16 = sphi 0, %s20
      %p17 = scmp.ge.s32.totalorder %s16, 6
      %s26 = sphi 0, %s28
      %s29 = sphi 0, %s26
      %s30 = sphi 0, %s29
      %s46 = sphi 0, %s30
      %s50 = sphi 0, %s50
      %s52 = sphi 0, %s50
      %s53 = sphi 0, %s52
      %s67 = sphi 0, %s53
      %s71 = sphi 0, %s71
      %s73 = sphi 0, %s71
      %s74 = sphi 0, %s73
      %s88 = sphi 0, %s74
      %s94 = sphi 0, %s96
      %s97 = sphi 0, %s94
      %s98 = sphi 0, %s97
      %s114 = sphi 0, %s98
      %s120 = sphi 0, %s122
      %s123 = sphi 0, %s120
      %s124 = sphi 0, %s123
      %s140 = sphi 0, %s124
    $region4: #{tpu_custom_call.1} parent=1 // loop_header_branch
      %19 = sbr.rel (%p17) target = $region8
    $region5: #{tpu_custom_call.1} parent=1 // loop_body
      %s21 = ssub.s32 %s16, 1
      %s22 = ssub.s32 %s16, 2
      %s23 = sadd.s32 %s16, 1
      %s24 = ssub.s32 %s16, %s23
      %p25 = scmp.eq.s32.totalorder %s24, 0
      %s27 = sadd.s32 %s26, 1
      %s28 = scalar_select %p25, %s26, %s27
      %p31 = pneg %p25
      %p32 = scmp.eq.s32.totalorder %s16, 3
      %p33 = por %p31, %p32
      %p34 = scmp.ne.s32.totalorder %s26, %s29
      %p35 = scmp.eq.s32.totalorder %s16, 0
      %p36 = por %p34, %p35
      %p37 = scmp.ne.s32.totalorder %s26, %s29
      %p38 = scmp.eq.s32.totalorder %s21, 3
      %p39 = por %p37, %p38
      %p40 = scmp.ne.s32.totalorder %s29, %s30
      %p41 = scmp.eq.s32.totalorder %s21, 0
      %p42 = por %p40, %p41
      %p43 = scmp.ne.s32.totalorder %s29, %s30
      %p44 = scmp.eq.s32.totalorder %s22, 3
      %p45 = por %p43, %p44
      %p47 = scmp.ne.s32.totalorder %s30, %s46
      %p48 = scmp.eq.s32.totalorder %s22, 0
      %p49 = por %p47, %p48
      %s51 = sadd.s32 %s50, 1
      %p54 = scmp.eq.s32.totalorder %s16, 3
      %p55 = scmp.ne.s32.totalorder %s50, %s52
      %p56 = scmp.eq.s32.totalorder %s16, 0
      %p57 = por %p55, %p56
      %p58 = scmp.ne.s32.totalorder %s50, %s52
      %p59 = scmp.eq.s32.totalorder %s21, 3
      %p60 = por %p58, %p59
      %p61 = scmp.ne.s32.totalorder %s52, %s53
      %p62 = scmp.eq.s32.totalorder %s21, 0
      %p63 = por %p61, %p62
      %p64 = scmp.ne.s32.totalorder %s52, %s53
      %p65 = scmp.eq.s32.totalorder %s22, 3
      %p66 = por %p64, %p65
      %p68 = scmp.ne.s32.totalorder %s53, %s67
      %p69 = scmp.eq.s32.totalorder %s22, 0
      %p70 = por %p68, %p69
      %s72 = sadd.s32 %s71, 1
      %p75 = scmp.eq.s32.totalorder %s16, 3
      %p76 = scmp.ne.s32.totalorder %s71, %s73
      %p77 = scmp.eq.s32.totalorder %s16, 0
      %p78 = por %p76, %p77
      %p79 = scmp.ne.s32.totalorder %s71, %s73
      %p80 = scmp.eq.s32.totalorder %s21, 3
      %p81 = por %p79, %p80
      %p82 = scmp.ne.s32.totalorder %s73, %s74
      %p83 = scmp.eq.s32.totalorder %s21, 0
      %p84 = por %p82, %p83
      %p85 = scmp.ne.s32.totalorder %s73, %s74
      %p86 = scmp.eq.s32.totalorder %s22, 3
      %p87 = por %p85, %p86
      %p89 = scmp.ne.s32.totalorder %s74, %s88
      %p90 = scmp.eq.s32.totalorder %s22, 0
      %p91 = por %p89, %p90
      %s92 = ssub.s32 %s16, %s23
      %p93 = scmp.eq.s32.totalorder %s92, 0
      %s95 = sadd.s32 %s94, 1
      %s96 = scalar_select %p93, %s94, %s95
      %p99 = pneg %p93
      %p100 = scmp.eq.s32.totalorder %s16, 3
      %p101 = por %p99, %p100
      %p102 = scmp.ne.s32.totalorder %s94, %s97
      %p103 = scmp.eq.s32.totalorder %s16, 0
      %p104 = por %p102, %p103
      %p105 = scmp.ne.s32.totalorder %s94, %s97
      %p106 = scmp.eq.s32.totalorder %s21, 3
      %p107 = por %p105, %p106
      %p108 = scmp.ne.s32.totalorder %s97, %s98
      %p109 = scmp.eq.s32.totalorder %s21, 0
      %p110 = por %p108, %p109
      %p111 = scmp.ne.s32.totalorder %s97, %s98
      %p112 = scmp.eq.s32.totalorder %s22, 3
      %p113 = por %p111, %p112
      %p115 = scmp.ne.s32.totalorder %s98, %s114
      %p116 = scmp.eq.s32.totalorder %s22, 0
      %p117 = por %p115, %p116
      %s118 = ssub.s32 %s16, %s23
      %p119 = scmp.eq.s32.totalorder %s118, 0
      %s121 = sadd.s32 %s120, 1
      %s122 = scalar_select %p119, %s120, %s121
      %p125 = pneg %p119
      %p126 = scmp.eq.s32.totalorder %s16, 3
      %p127 = por %p125, %p126
      %p128 = scmp.ne.s32.totalorder %s120, %s123
      %p129 = scmp.eq.s32.totalorder %s16, 0
      %p130 = por %p128, %p129
      %p131 = scmp.ne.s32.totalorder %s120, %s123
      %p132 = scmp.eq.s32.totalorder %s21, 3
      %p133 = por %p131, %p132
      %p134 = scmp.ne.s32.totalorder %s123, %s124
      %p135 = scmp.eq.s32.totalorder %s21, 0
      %p136 = por %p134, %p135
      %p137 = scmp.ne.s32.totalorder %s123, %s124
      %p138 = scmp.eq.s32.totalorder %s22, 3
      %p139 = por %p137, %p138
      %p141 = scmp.ne.s32.totalorder %s124, %s140
      %p142 = scmp.eq.s32.totalorder %s22, 0
      %p143 = por %p141, %p142
      %p144 = scmp.le.s32.totalorder 1, %s16
      %p145 = scmp.lt.s32.totalorder %s16, 5
      %p146 = pnand %p144, %p145
      %p147 = pneg %p146
      // Predicated region
      $region9: #{tpu_custom_call.1} parent=5 // pred_check
        _
      $region10: #{tpu_custom_call.1} parent=5 // pred_check_branch
        %149 = sbr.rel (%p146) target = $region12
      $region11: #{tpu_custom_call.1} parent=5 // pred_region
        %s150 = ssub.s32 %s16, 1
        // Predicated region
        $region13: #{tpu_custom_call.1} parent=11 // pred_check
          %p151 = pneg %p63
        $region14: #{tpu_custom_call.1} parent=11 // pred_check_branch
          %153 = sbr.rel (%p151) target = $region16
        $region15: #{tpu_custom_call.1} parent=11 // pred_region
          _
        $region16: #{tpu_custom_call.1} parent=11 // pred_fallthru
          _
        // Predicated region
        $region17: #{tpu_custom_call.1} parent=11 // pred_check
          %p154 = pneg %p84
        $region18: #{tpu_custom_call.1} parent=11 // pred_check_branch
          %156 = sbr.rel (%p154) target = $region20
        $region19: #{tpu_custom_call.1} parent=11 // pred_region
          _
        $region20: #{tpu_custom_call.1} parent=11 // pred_fallthru
          _
      $region12: #{tpu_custom_call.1} parent=5 // pred_fallthru
        _
      %p157 = scmp.lt.s32.totalorder %s16, 4
      // Predicated region
      $region21: #{tpu_custom_call.1} parent=5 // pred_check
        %p158 = pneg %p157
      $region22: #{tpu_custom_call.1} parent=5 // pred_check_branch
        %160 = sbr.rel (%p158) target = $region24
      $region23: #{tpu_custom_call.1} parent=5 // pred_region
        // Predicated region
        $region25: #{tpu_custom_call.1} parent=23 // pred_check
          %p161 = pneg %p36
        $region26: #{tpu_custom_call.1} parent=23 // pred_check_branch
          %163 = sbr.rel (%p161) target = $region28
        $region27: #{tpu_custom_call.1} parent=23 // pred_region
          %s164 = sand.u32 %s26, 1
          %s165 = scalar_lea.sflag [#allocation3], %s164
          %s166 = sand.u32 %s26, 1
          %s167 = smul.addr %s166, 256
          %s168 = scalar_lea.vmem [#allocation2], %s167
          %s169 = smul.u32 32, %s16
          %s170 = ssub.s32 100, %s169
          %p171 = scmp.lt.s32.totalorder %s170, 32
          %s172 = scalar_select %p171, %s170, 32
          %s173 = smul.u32 4, %s172
          %s174 = smul.u32 %s173, 2
          %s175 = ssub.s32 256, %s174
          %s176 = sshll.u32 %s175, 4
          %177 = vsyncadd %s165, %s176
          %p178 = scmp.ne.s32.totalorder 0, %s174
          %s179 = smul.addr %s169, 2
          %s180 = smul.addr %s179, 4
          %s181 = scalar_lea.hbm %s0, %s180
          %s182 = smul.u32 8, %s172
          %s183 = sshll.u32 %s181, 4
          %s184 = int_to_ptr.hbm [resolvable:$true] %s183
          %s185 = sshll.u32 %s168, 4
          %s186 = int_to_ptr.vmem [resolvable:$true] %s185
          %s187 = sshll.u32 %s182, 4
          %191 = dma.hbm_to_vmem [thread:$0]  (%p178), %s184, %s187, %s186, %s165, 128, 128, 8
        $region28: #{tpu_custom_call.1} parent=23 // pred_fallthru
          _
        // Predicated region
        $region29: #{tpu_custom_call.1} parent=23 // pred_check
          %p192 = pneg %p104
        $region30: #{tpu_custom_call.1} parent=23 // pred_check_branch
          %194 = sbr.rel (%p192) target = $region32
        $region31: #{tpu_custom_call.1} parent=23 // pred_region
          %s195 = smul.u32 32, %s16
          %s196 = ssub.s32 100, %s195
          %p197 = scmp.lt.s32.totalorder %s196, 32
          %s198 = scalar_select %p197, %s196, 32
          %s199 = smul.u32 4, %s198
          %p200 = scmp.lt.s32.totalorder %s195, 99
          %s201 = scalar_select %p200, %s195, 99
          %s202 = smul.addr %s201, 4
          %s203 = scalar_lea.vmem %s3, %s202
          %s204 = smul.u32 32, %s16
          %s205 = ssub.s32 100, %s204
          %p206 = scmp.lt.s32.totalorder %s205, 32
          %s207 = scalar_select %p206, %s205, 32
          %s208 = smul.u32 4, %s207
        $region32: #{tpu_custom_call.1} parent=23 // pred_fallthru
          _
      $region24: #{tpu_custom_call.1} parent=5 // pred_fallthru
        _
      %p209 = scmp.le.s32.totalorder 1, %s16
      %p210 = scmp.lt.s32.totalorder %s16, 5
      %p211 = pnand %p209, %p210
      %p212 = pneg %p211
      // Predicated region
      $region33: #{tpu_custom_call.1} parent=5 // pred_check
        _
      $region34: #{tpu_custom_call.1} parent=5 // pred_check_branch
        %214 = sbr.rel (%p211) target = $region36
      $region35: #{tpu_custom_call.1} parent=5 // pred_region
        %s215 = ssub.s32 %s16, 1
        %s216 = sand.u32 %s29, 1
        %s217 = scalar_lea.sflag [#allocation3], %s216
        %s218 = sand.u32 %s29, 1
        %s219 = smul.addr %s218, 256
        %s220 = scalar_lea.vmem [#allocation2], %s219
        // Predicated region
        $region37: #{tpu_custom_call.1} parent=35 // pred_check
          %p221 = pneg %p42
        $region38: #{tpu_custom_call.1} parent=35 // pred_check_branch
          %223 = sbr.rel (%p221) target = $region40
        $region39: #{tpu_custom_call.1} parent=35 // pred_region
          %225 = dma.done %s217, 4096
        $region40: #{tpu_custom_call.1} parent=35 // pred_fallthru
          _
        %s226 = sand.u32 %s29, 1
        %s227 = scalar_lea.sflag [#allocation3], %s226
        %s228 = sand.u32 %s29, 1
        %s229 = smul.addr %s228, 256
        %s230 = scalar_lea.vmem [#allocation2], %s229
        %p231 = pneg %p42
        %p232 = pneg %p39
        %p233 = pneg %p63
        %p234 = pneg %p60
        %p235 = pneg %p84
        %p236 = pneg %p81
        %s237 = smul.u32 32, %s21
        %s238 = ssub.s32 100, %s237
        %p239 = scmp.lt.s32.totalorder %s238, 32
        %s240 = scalar_select %p239, %s238, 32
        %s241 = smul.u32 4, %s240
        %p242 = scmp.lt.s32.totalorder %s237, 99
        %s243 = scalar_select %p242, %s237, 99
        %s244 = smul.addr %s243, 4
        %s245 = scalar_lea.vmem %s3, %s244
        %p246 = pneg %p110
        %p247 = pneg %p107
        %p248 = pneg %p136
        %p249 = pneg %p133
        %s250 = sand.u32 %s123, 1
        %s251 = scalar_lea.sflag [#allocation4], %s250
        %s252 = sand.u32 %s123, 1
        %s253 = scalar_lea.vmem [#allocation5], %s252
        %s254 = smul.u32 32, %s21
        %s255 = ssub.s32 100, %s254
        %p256 = scmp.lt.s32.totalorder %s255, 32
        %s257 = scalar_select %p256, %s255, 32
        %s258 = smul.u32 4, %s257
        %s259 = smul.u32 %s258, 2
        %s260 = smul.u32 32, %s21
        %s261 = ssub.s32 100, %s260
        %p262 = scmp.lt.s32.totalorder %s261, 32
        %s263 = scalar_select %p262, %s261, 32
        %s264 = smul.u32 4, %s263
        %p265 = scmp.lt.s32.totalorder %s260, 99
        %s266 = scalar_select %p265, %s260, 99
        %s267 = smul.addr %s266, 4
        %s268 = scalar_lea.vmem %s3, %s267
        %s269 = smul.u32 32, %s21
        %s270 = ssub.s32 100, %s269
        %p271 = scmp.lt.s32.totalorder %s270, 32
        %s272 = scalar_select %p271, %s270, 32
        %s273 = smul.u32 4, %s272
        %s274 = smul.u32 %s21, 256
        %v275 = vlaneseq
        %v276 = vshrl.u32 %v275, 7
        %v277 = vadd.s32 %v276, 8
        %v278 = vadd.s32 %v276, 16
        %v279 = vadd.s32 %v276, 24
        %v280 = vadd.s32 %v276, 32
        %v281 = vadd.s32 %v276, 40
        %v282 = vadd.s32 %v276, 48
        %v283 = vadd.s32 %v276, 56
        %v284 = vadd.s32 %v276, 64
        %v285 = vadd.s32 %v276, 72
        %v286 = vadd.s32 %v276, 80
        %v287 = vadd.s32 %v276, 88
        %v288 = vadd.s32 %v276, 96
        %v289 = vadd.s32 %v276, 104
        %v290 = vadd.s32 %v276, 112
        %v291 = vadd.s32 %v276, 120
        %v292 = vadd.s32 %v276, 128
        %v293 = vadd.s32 %v276, 136
        %v294 = vadd.s32 %v276, 144
        %v295 = vadd.s32 %v276, 152
        %v296 = vadd.s32 %v276, 160
        %v297 = vadd.s32 %v276, 168
        %v298 = vadd.s32 %v276, 176
        %v299 = vadd.s32 %v276, 184
        %v300 = vadd.s32 %v276, 192
        %v301 = vadd.s32 %v276, 200
        %v302 = vadd.s32 %v276, 208
        %v303 = vadd.s32 %v276, 216
        %v304 = vadd.s32 %v276, 224
        %v305 = vadd.s32 %v276, 232
        %v306 = vadd.s32 %v276, 240
        %v307 = vadd.s32 %v276, 248
        %v308 = vstv %s274
        %v309 = vadd.s32 %v308, %v276
        %v310 = vadd.s32 %v308, %v277
        %v311 = vadd.s32 %v308, %v278
        %v312 = vadd.s32 %v308, %v279
        %v313 = vadd.s32 %v308, %v280
        %v314 = vadd.s32 %v308, %v281
        %v315 = vadd.s32 %v308, %v282
        %v316 = vadd.s32 %v308, %v283
        %v317 = vadd.s32 %v308, %v284
        %v318 = vadd.s32 %v308, %v285
        %v319 = vadd.s32 %v308, %v286
        %v320 = vadd.s32 %v308, %v287
        %v321 = vadd.s32 %v308, %v288
        %v322 = vadd.s32 %v308, %v289
        %v323 = vadd.s32 %v308, %v290
        %v324 = vadd.s32 %v308, %v291
        %v325 = vadd.s32 %v308, %v292
        %v326 = vadd.s32 %v308, %v293
        %v327 = vadd.s32 %v308, %v294
        %v328 = vadd.s32 %v308, %v295
        %v329 = vadd.s32 %v308, %v296
        %v330 = vadd.s32 %v308, %v297
        %v331 = vadd.s32 %v308, %v298
        %v332 = vadd.s32 %v308, %v299
        %v333 = vadd.s32 %v308, %v300
        %v334 = vadd.s32 %v308, %v301
        %v335 = vadd.s32 %v308, %v302
        %v336 = vadd.s32 %v308, %v303
        %v337 = vadd.s32 %v308, %v304
        %v338 = vadd.s32 %v308, %v305
        %v339 = vadd.s32 %v308, %v306
        %v340 = vadd.s32 %v308, %v307
        %vm341 = vcmp.lt.s32.totalorder %v309, 800
        %vm342 = vcmp.lt.s32.totalorder %v310, 800
        %vm343 = vcmp.lt.s32.totalorder %v311, 800
        %vm344 = vcmp.lt.s32.totalorder %v312, 800
        %vm345 = vcmp.lt.s32.totalorder %v313, 800
        %vm346 = vcmp.lt.s32.totalorder %v314, 800
        %vm347 = vcmp.lt.s32.totalorder %v315, 800
        %vm348 = vcmp.lt.s32.totalorder %v316, 800
        %vm349 = vcmp.lt.s32.totalorder %v317, 800
        %vm350 = vcmp.lt.s32.totalorder %v318, 800
        %vm351 = vcmp.lt.s32.totalorder %v319, 800
        %vm352 = vcmp.lt.s32.totalorder %v320, 800
        %vm353 = vcmp.lt.s32.totalorder %v321, 800
        %vm354 = vcmp.lt.s32.totalorder %v322, 800
        %vm355 = vcmp.lt.s32.totalorder %v323, 800
        %vm356 = vcmp.lt.s32.totalorder %v324, 800
        %vm357 = vcmp.lt.s32.totalorder %v325, 800
        %vm358 = vcmp.lt.s32.totalorder %v326, 800
        %vm359 = vcmp.lt.s32.totalorder %v327, 800
        %vm360 = vcmp.lt.s32.totalorder %v328, 800
        %vm361 = vcmp.lt.s32.totalorder %v329, 800
        %vm362 = vcmp.lt.s32.totalorder %v330, 800
        %vm363 = vcmp.lt.s32.totalorder %v331, 800
        %vm364 = vcmp.lt.s32.totalorder %v332, 800
        %vm365 = vcmp.lt.s32.totalorder %v333, 800
        %vm366 = vcmp.lt.s32.totalorder %v334, 800
        %vm367 = vcmp.lt.s32.totalorder %v335, 800
        %vm368 = vcmp.lt.s32.totalorder %v336, 800
        %vm369 = vcmp.lt.s32.totalorder %v337, 800
        %vm370 = vcmp.lt.s32.totalorder %v338, 800
        %vm371 = vcmp.lt.s32.totalorder %v339, 800
        %vm372 = vcmp.lt.s32.totalorder %v340, 800
        %v373 = vld [vmem:[%s220] sm:$0xff]
        %v374 = vld [vmem:[%s220 + $0x8] sm:$0xff]
        %v375 = vld [vmem:[%s220 + $0x10] sm:$0xff]
        %v376 = vld [vmem:[%s220 + $0x18] sm:$0xff]
        %v377 = vld [vmem:[%s220 + $0x20] sm:$0xff]
        %v378 = vld [vmem:[%s220 + $0x28] sm:$0xff]
        %v379 = vld [vmem:[%s220 + $0x30] sm:$0xff]
        %v380 = vld [vmem:[%s220 + $0x38] sm:$0xff]
        %v381 = vld [vmem:[%s220 + $0x40] sm:$0xff]
        %v382 = vld [vmem:[%s220 + $0x48] sm:$0xff]
        %v383 = vld [vmem:[%s220 + $0x50] sm:$0xff]
        %v384 = vld [vmem:[%s220 + $0x58] sm:$0xff]
        %v385 = vld [vmem:[%s220 + $0x60] sm:$0xff]
        %v386 = vld [vmem:[%s220 + $0x68] sm:$0xff]
        %v387 = vld [vmem:[%s220 + $0x70] sm:$0xff]
        %v388 = vld [vmem:[%s220 + $0x78] sm:$0xff]
        %v389 = vld [vmem:[%s220 + $0x80] sm:$0xff]
        %v390 = vld [vmem:[%s220 + $0x88] sm:$0xff]
        %v391 = vld [vmem:[%s220 + $0x90] sm:$0xff]
        %v392 = vld [vmem:[%s220 + $0x98] sm:$0xff]
        %v393 = vld [vmem:[%s220 + $0xa0] sm:$0xff]
        %v394 = vld [vmem:[%s220 + $0xa8] sm:$0xff]
        %v395 = vld [vmem:[%s220 + $0xb0] sm:$0xff]
        %v396 = vld [vmem:[%s220 + $0xb8] sm:$0xff]
        %v397 = vld [vmem:[%s220 + $0xc0] sm:$0xff]
        %v398 = vld [vmem:[%s220 + $0xc8] sm:$0xff]
        %v399 = vld [vmem:[%s220 + $0xd0] sm:$0xff]
        %v400 = vld [vmem:[%s220 + $0xd8] sm:$0xff]
        %v401 = vld [vmem:[%s220 + $0xe0] sm:$0xff]
        %v402 = vld [vmem:[%s220 + $0xe8] sm:$0xff]
        %v403 = vld [vmem:[%s220 + $0xf0] sm:$0xff]
        %v404 = vld [vmem:[%s220 + $0xf8] sm:$0xff]
        %v405 = vld [vmem:[%s1] sm:$0xf]
        %v406 = vld [vmem:[%s1 + $0x4] sm:$0xf]
        %v407 = vld [vmem:[%s1 + $0x8] sm:$0xf]
        %v408 = vld [vmem:[%s1 + $0xc] sm:$0xf]
        %v409 = vld [vmem:[%s1 + $0x10] sm:$0xf]
        %v410 = vld [vmem:[%s1 + $0x14] sm:$0xf]
        %v411 = vld [vmem:[%s1 + $0x18] sm:$0xf]
        %v412 = vld [vmem:[%s1 + $0x1c] sm:$0xf]
        %v413 = vld [vmem:[%s1 + $0x20] sm:$0xf]
        %v414 = vld [vmem:[%s1 + $0x24] sm:$0xf]
        %v415 = vld [vmem:[%s1 + $0x28] sm:$0xf]
        %v416 = vld [vmem:[%s1 + $0x2c] sm:$0xf]
        %v417 = vld [vmem:[%s1 + $0x30] sm:$0xf]
        %v418 = vld [vmem:[%s1 + $0x34] sm:$0xf]
        %v419 = vld [vmem:[%s1 + $0x38] sm:$0xf]
        %v420 = vld [vmem:[%s1 + $0x3c] sm:$0xf]
        %v421 = vld [vmem:[%s1 + $0x40] sm:$0xf]
        %v422 = vld [vmem:[%s1 + $0x44] sm:$0xf]
        %v423 = vld [vmem:[%s1 + $0x48] sm:$0xf]
        %v424 = vld [vmem:[%s1 + $0x4c] sm:$0xf]
        %v425 = vld [vmem:[%s1 + $0x50] sm:$0xf]
        %v426 = vld [vmem:[%s1 + $0x54] sm:$0xf]
        %v427 = vld [vmem:[%s1 + $0x58] sm:$0xf]
        %v428 = vld [vmem:[%s1 + $0x5c] sm:$0xf]
        %v429 = vld [vmem:[%s1 + $0x60] sm:$0xf]
        %v430 = vld [vmem:[%s1 + $0x64] sm:$0xf]
        %v431 = vld [vmem:[%s1 + $0x68] sm:$0xf]
        %v432 = vld [vmem:[%s1 + $0x6c] sm:$0xf]
        %v433 = vld [vmem:[%s1 + $0x70] sm:$0xf]
        %v434 = vld [vmem:[%s1 + $0x74] sm:$0xf]
        %v435 = vld [vmem:[%s1 + $0x78] sm:$0xf]
        %v436 = vld [vmem:[%s1 + $0x7c] sm:$0xf]
        %v437 = vld [vmem:[%s2] sm:$0x1]
        %v439 = vperm.slane %v437, 0
        %v473 = vunpack.c.l.b16 %v373
        %v474 = vunpack.c.h.b16 %v373
        %v475 = vunpack.c.l.b16 %v374
        %v476 = vunpack.c.h.b16 %v374
        %v477 = vunpack.c.l.b16 %v375
        %v478 = vunpack.c.h.b16 %v375
        %v479 = vunpack.c.l.b16 %v376
        %v480 = vunpack.c.h.b16 %v376
        %v481 = vunpack.c.l.b16 %v377
        %v482 = vunpack.c.h.b16 %v377
        %v483 = vunpack.c.l.b16 %v378
        %v484 = vunpack.c.h.b16 %v378
        %v485 = vunpack.c.l.b16 %v379
        %v486 = vunpack.c.h.b16 %v379
        %v487 = vunpack.c.l.b16 %v380
        %v488 = vunpack.c.h.b16 %v380
        %v489 = vunpack.c.l.b16 %v381
        %v490 = vunpack.c.h.b16 %v381
        %v491 = vunpack.c.l.b16 %v382
        %v492 = vunpack.c.h.b16 %v382
        %v493 = vunpack.c.l.b16 %v383
        %v494 = vunpack.c.h.b16 %v383
        %v495 = vunpack.c.l.b16 %v384
        %v496 = vunpack.c.h.b16 %v384
        %v497 = vunpack.c.l.b16 %v385
        %v498 = vunpack.c.h.b16 %v385
        %v499 = vunpack.c.l.b16 %v386
        %v500 = vunpack.c.h.b16 %v386
        %v501 = vunpack.c.l.b16 %v387
        %v502 = vunpack.c.h.b16 %v387
        %v503 = vunpack.c.l.b16 %v388
        %v504 = vunpack.c.h.b16 %v388
        %v505 = vunpack.c.l.b16 %v389
        %v506 = vunpack.c.h.b16 %v389
        %v507 = vunpack.c.l.b16 %v390
        %v508 = vunpack.c.h.b16 %v390
        %v509 = vunpack.c.l.b16 %v391
        %v510 = vunpack.c.h.b16 %v391
        %v511 = vunpack.c.l.b16 %v392
        %v512 = vunpack.c.h.b16 %v392
        %v513 = vunpack.c.l.b16 %v393
        %v514 = vunpack.c.h.b16 %v393
        %v515 = vunpack.c.l.b16 %v394
        %v516 = vunpack.c.h.b16 %v394
        %v517 = vunpack.c.l.b16 %v395
        %v518 = vunpack.c.h.b16 %v395
        %v519 = vunpack.c.l.b16 %v396
        %v520 = vunpack.c.h.b16 %v396
        %v521 = vunpack.c.l.b16 %v397
        %v522 = vunpack.c.h.b16 %v397
        %v523 = vunpack.c.l.b16 %v398
        %v524 = vunpack.c.h.b16 %v398
        %v525 = vunpack.c.l.b16 %v399
        %v526 = vunpack.c.h.b16 %v399
        %v527 = vunpack.c.l.b16 %v400
        %v528 = vunpack.c.h.b16 %v400
        %v529 = vunpack.c.l.b16 %v401
        %v530 = vunpack.c.h.b16 %v401
        %v531 = vunpack.c.l.b16 %v402
        %v532 = vunpack.c.h.b16 %v402
        %v533 = vunpack.c.l.b16 %v403
        %v534 = vunpack.c.h.b16 %v403
        %v535 = vunpack.c.l.b16 %v404
        %v536 = vunpack.c.h.b16 %v404
        %v537 = vpack.c.b16 %v475, %v473
        %v538 = vpack.c.b16 %v476, %v474
        %v539 = vpack.c.b16 %v479, %v477
        %v540 = vpack.c.b16 %v480, %v478
        %v541 = vpack.c.b16 %v483, %v481
        %v542 = vpack.c.b16 %v484, %v482
        %v543 = vpack.c.b16 %v487, %v485
        %v544 = vpack.c.b16 %v488, %v486
        %v545 = vpack.c.b16 %v491, %v489
        %v546 = vpack.c.b16 %v492, %v490
        %v547 = vpack.c.b16 %v495, %v493
        %v548 = vpack.c.b16 %v496, %v494
        %v549 = vpack.c.b16 %v499, %v497
        %v550 = vpack.c.b16 %v500, %v498
        %v551 = vpack.c.b16 %v503, %v501
        %v552 = vpack.c.b16 %v504, %v502
        %v553 = vpack.c.b16 %v507, %v505
        %v554 = vpack.c.b16 %v508, %v506
        %v555 = vpack.c.b16 %v511, %v509
        %v556 = vpack.c.b16 %v512, %v510
        %v557 = vpack.c.b16 %v515, %v513
        %v558 = vpack.c.b16 %v516, %v514
        %v559 = vpack.c.b16 %v519, %v517
        %v560 = vpack.c.b16 %v520, %v518
        %v561 = vpack.c.b16 %v523, %v521
        %v562 = vpack.c.b16 %v524, %v522
        %v563 = vpack.c.b16 %v527, %v525
        %v564 = vpack.c.b16 %v528, %v526
        %v565 = vpack.c.b16 %v531, %v529
        %v566 = vpack.c.b16 %v532, %v530
        %v567 = vpack.c.b16 %v535, %v533
        %v568 = vpack.c.b16 %v536, %v534
        %v633 = vunpack.c.l.b16 %v405
        %v634 = vunpack.c.l.b16 %v406
        %v635 = vunpack.c.l.b16 %v407
        %v636 = vunpack.c.l.b16 %v408
        %v637 = vunpack.c.l.b16 %v409
        %v638 = vunpack.c.l.b16 %v410
        %v639 = vunpack.c.l.b16 %v411
        %v640 = vunpack.c.l.b16 %v412
        %v641 = vunpack.c.l.b16 %v413
        %v642 = vunpack.c.l.b16 %v414
        %v643 = vunpack.c.l.b16 %v415
        %v644 = vunpack.c.l.b16 %v416
        %v645 = vunpack.c.l.b16 %v417
        %v646 = vunpack.c.l.b16 %v418
        %v647 = vunpack.c.l.b16 %v419
        %v648 = vunpack.c.l.b16 %v420
        %v649 = vunpack.c.l.b16 %v421
        %v650 = vunpack.c.l.b16 %v422
        %v651 = vunpack.c.l.b16 %v423
        %v652 = vunpack.c.l.b16 %v424
        %v653 = vunpack.c.l.b16 %v425
        %v654 = vunpack.c.l.b16 %v426
        %v655 = vunpack.c.l.b16 %v427
        %v656 = vunpack.c.l.b16 %v428
        %v657 = vunpack.c.l.b16 %v429
        %v658 = vunpack.c.l.b16 %v430
        %v659 = vunpack.c.l.b16 %v431
        %v660 = vunpack.c.l.b16 %v432
        %v661 = vunpack.c.l.b16 %v433
        %v662 = vunpack.c.l.b16 %v434
        %v663 = vunpack.c.l.b16 %v435
        %v664 = vunpack.c.l.b16 %v436
        %v665 = vpack.c.b16 %v634, %v633
        %v666 = vpack.c.b16 %v636, %v635
        %v667 = vpack.c.b16 %v638, %v637
        %v668 = vpack.c.b16 %v640, %v639
        %v669 = vpack.c.b16 %v642, %v641
        %v670 = vpack.c.b16 %v644, %v643
        %v671 = vpack.c.b16 %v646, %v645
        %v672 = vpack.c.b16 %v648, %v647
        %v673 = vpack.c.b16 %v650, %v649
        %v674 = vpack.c.b16 %v652, %v651
        %v675 = vpack.c.b16 %v654, %v653
        %v676 = vpack.c.b16 %v656, %v655
        %v677 = vpack.c.b16 %v658, %v657
        %v678 = vpack.c.b16 %v660, %v659
        %v679 = vpack.c.b16 %v662, %v661
        %v680 = vpack.c.b16 %v664, %v663
        %697 = vmatpush.bf16.msra.mxu0 %v672
        %698 = vmatpush.bf16.msra.mxu0 %v671
        %699 = vmatpush.bf16.msra.mxu0 %v670
        %700 = vmatpush.bf16.msra.mxu0 %v669
        %701 = vmatpush.bf16.msra.mxu0 %v668
        %702 = vmatpush.bf16.msra.mxu0 %v667
        %703 = vmatpush.bf16.msra.mxu0 %v666
        %704 = vmatpush.bf16.msra.mxu0 %v665
        %705 = vmatmul.bf16.gmra.mxu0 %v537
        %v706 = vpop.f32.mrf.mxu0
        %v707 = vadd.f32 %v439, %v706
        %v708 = vpop.f32.mrf.mxu0
        %v709 = vadd.f32 %v439, %v708
        %710 = vmatmul.bf16.gmra.mxu0 %v539
        %v711 = vpop.f32.mrf.mxu0
        %v712 = vadd.f32 %v439, %v711
        %v713 = vpop.f32.mrf.mxu0
        %v714 = vadd.f32 %v439, %v713
        %715 = vmatmul.bf16.gmra.mxu0 %v541
        %v716 = vpop.f32.mrf.mxu0
        %v717 = vadd.f32 %v439, %v716
        %v718 = vpop.f32.mrf.mxu0
        %v719 = vadd.f32 %v439, %v718
        %720 = vmatmul.bf16.gmra.mxu0 %v543
        %v721 = vpop.f32.mrf.mxu0
        %v722 = vadd.f32 %v439, %v721
        %v723 = vpop.f32.mrf.mxu0
        %v724 = vadd.f32 %v439, %v723
        %725 = vmatmul.bf16.gmra.mxu0 %v545
        %v726 = vpop.f32.mrf.mxu0
        %v727 = vadd.f32 %v439, %v726
        %v728 = vpop.f32.mrf.mxu0
        %v729 = vadd.f32 %v439, %v728
        %730 = vmatmul.bf16.gmra.mxu0 %v547
        %v731 = vpop.f32.mrf.mxu0
        %v732 = vadd.f32 %v439, %v731
        %v733 = vpop.f32.mrf.mxu0
        %v734 = vadd.f32 %v439, %v733
        %735 = vmatmul.bf16.gmra.mxu0 %v549
        %v736 = vpop.f32.mrf.mxu0
        %v737 = vadd.f32 %v439, %v736
        %v738 = vpop.f32.mrf.mxu0
        %v739 = vadd.f32 %v439, %v738
        %740 = vmatmul.bf16.gmra.mxu0 %v551
        %v741 = vpop.f32.mrf.mxu0
        %v742 = vadd.f32 %v439, %v741
        %v743 = vpop.f32.mrf.mxu0
        %v744 = vadd.f32 %v439, %v743
        %745 = vmatmul.bf16.gmra.mxu0 %v553
        %v746 = vpop.f32.mrf.mxu0
        %v747 = vadd.f32 %v439, %v746
        %v748 = vpop.f32.mrf.mxu0
        %v749 = vadd.f32 %v439, %v748
        %750 = vmatmul.bf16.gmra.mxu0 %v555
        %v751 = vpop.f32.mrf.mxu0
        %v752 = vadd.f32 %v439, %v751
        %v753 = vpop.f32.mrf.mxu0
        %v754 = vadd.f32 %v439, %v753
        %755 = vmatmul.bf16.gmra.mxu0 %v557
        %v756 = vpop.f32.mrf.mxu0
        %v757 = vadd.f32 %v439, %v756
        %v758 = vpop.f32.mrf.mxu0
        %v759 = vadd.f32 %v439, %v758
        %760 = vmatmul.bf16.gmra.mxu0 %v559
        %v761 = vpop.f32.mrf.mxu0
        %v762 = vadd.f32 %v439, %v761
        %v763 = vpop.f32.mrf.mxu0
        %v764 = vadd.f32 %v439, %v763
        %765 = vmatmul.bf16.gmra.mxu0 %v561
        %v766 = vpop.f32.mrf.mxu0
        %v767 = vadd.f32 %v439, %v766
        %v768 = vpop.f32.mrf.mxu0
        %v769 = vadd.f32 %v439, %v768
        %770 = vmatmul.bf16.gmra.mxu0 %v563
        %v771 = vpop.f32.mrf.mxu0
        %v772 = vadd.f32 %v439, %v771
        %v773 = vpop.f32.mrf.mxu0
        %v774 = vadd.f32 %v439, %v773
        %775 = vmatmul.bf16.gmra.mxu0 %v565
        %v776 = vpop.f32.mrf.mxu0
        %v777 = vadd.f32 %v439, %v776
        %v778 = vpop.f32.mrf.mxu0
        %v779 = vadd.f32 %v439, %v778
        %780 = vmatmul.bf16.gmra.mxu0 %v567
        %v781 = vpop.f32.mrf.mxu0
        %v782 = vadd.f32 %v439, %v781
        %v783 = vpop.f32.mrf.mxu0
        %v784 = vadd.f32 %v439, %v783
        %785 = vdwg.mxu0
        %786 = vmatpush.bf16.msra.mxu0 %v680
        %787 = vmatpush.bf16.msra.mxu0 %v679
        %788 = vmatpush.bf16.msra.mxu0 %v678
        %789 = vmatpush.bf16.msra.mxu0 %v677
        %790 = vmatpush.bf16.msra.mxu0 %v676
        %791 = vmatpush.bf16.msra.mxu0 %v675
        %792 = vmatpush.bf16.msra.mxu0 %v674
        %793 = vmatpush.bf16.msra.mxu0 %v673
        %794 = vmatmul.bf16.gmra.mxu0 %v538
        %v795 = vpop.f32.mrf.mxu0
        %v796 = vadd.f32 %v707, %v795
        %v797 = vpop.f32.mrf.mxu0
        %v798 = vadd.f32 %v709, %v797
        %799 = vmatmul.bf16.gmra.mxu0 %v540
        %v800 = vpop.f32.mrf.mxu0
        %v801 = vadd.f32 %v712, %v800
        %v802 = vpop.f32.mrf.mxu0
        %v803 = vadd.f32 %v714, %v802
        %804 = vmatmul.bf16.gmra.mxu0 %v542
        %v805 = vpop.f32.mrf.mxu0
        %v806 = vadd.f32 %v717, %v805
        %v807 = vpop.f32.mrf.mxu0
        %v808 = vadd.f32 %v719, %v807
        %809 = vmatmul.bf16.gmra.mxu0 %v544
        %v810 = vpop.f32.mrf.mxu0
        %v811 = vadd.f32 %v722, %v810
        %v812 = vpop.f32.mrf.mxu0
        %v813 = vadd.f32 %v724, %v812
        %814 = vmatmul.bf16.gmra.mxu0 %v546
        %v815 = vpop.f32.mrf.mxu0
        %v816 = vadd.f32 %v727, %v815
        %v817 = vpop.f32.mrf.mxu0
        %v818 = vadd.f32 %v729, %v817
        %819 = vmatmul.bf16.gmra.mxu0 %v548
        %v820 = vpop.f32.mrf.mxu0
        %v821 = vadd.f32 %v732, %v820
        %v822 = vpop.f32.mrf.mxu0
        %v823 = vadd.f32 %v734, %v822
        %824 = vmatmul.bf16.gmra.mxu0 %v550
        %v825 = vpop.f32.mrf.mxu0
        %v826 = vadd.f32 %v737, %v825
        %v827 = vpop.f32.mrf.mxu0
        %v828 = vadd.f32 %v739, %v827
        %829 = vmatmul.bf16.gmra.mxu0 %v552
        %v830 = vpop.f32.mrf.mxu0
        %v831 = vadd.f32 %v742, %v830
        %v832 = vpop.f32.mrf.mxu0
        %v833 = vadd.f32 %v744, %v832
        %834 = vmatmul.bf16.gmra.mxu0 %v554
        %v835 = vpop.f32.mrf.mxu0
        %v836 = vadd.f32 %v747, %v835
        %v837 = vpop.f32.mrf.mxu0
        %v838 = vadd.f32 %v749, %v837
        %839 = vmatmul.bf16.gmra.mxu0 %v556
        %v840 = vpop.f32.mrf.mxu0
        %v841 = vadd.f32 %v752, %v840
        %v842 = vpop.f32.mrf.mxu0
        %v843 = vadd.f32 %v754, %v842
        %844 = vmatmul.bf16.gmra.mxu0 %v558
        %v845 = vpop.f32.mrf.mxu0
        %v846 = vadd.f32 %v757, %v845
        %v847 = vpop.f32.mrf.mxu0
        %v848 = vadd.f32 %v759, %v847
        %849 = vmatmul.bf16.gmra.mxu0 %v560
        %v850 = vpop.f32.mrf.mxu0
        %v851 = vadd.f32 %v762, %v850
        %v852 = vpop.f32.mrf.mxu0
        %v853 = vadd.f32 %v764, %v852
        %854 = vmatmul.bf16.gmra.mxu0 %v562
        %v855 = vpop.f32.mrf.mxu0
        %v856 = vadd.f32 %v767, %v855
        %v857 = vpop.f32.mrf.mxu0
        %v858 = vadd.f32 %v769, %v857
        %859 = vmatmul.bf16.gmra.mxu0 %v564
        %v860 = vpop.f32.mrf.mxu0
        %v861 = vadd.f32 %v772, %v860
        %v862 = vpop.f32.mrf.mxu0
        %v863 = vadd.f32 %v774, %v862
        %864 = vmatmul.bf16.gmra.mxu0 %v566
        %v865 = vpop.f32.mrf.mxu0
        %v866 = vadd.f32 %v777, %v865
        %v867 = vpop.f32.mrf.mxu0
        %v868 = vadd.f32 %v779, %v867
        %869 = vmatmul.bf16.gmra.mxu0 %v568
        %v870 = vpop.f32.mrf.mxu0
        %v871 = vadd.f32 %v782, %v870
        %v872 = vpop.f32.mrf.mxu0
        %v873 = vadd.f32 %v784, %v872
        %874 = vdwg.mxu0
        %v875 = vmax.f32 %v796, 0.0
        %v876 = vmax.f32 %v798, 0.0
        %v877 = vmax.f32 %v801, 0.0
        %v878 = vmax.f32 %v803, 0.0
        %v879 = vmax.f32 %v806, 0.0
        %v880 = vmax.f32 %v808, 0.0
        %v881 = vmax.f32 %v811, 0.0
        %v882 = vmax.f32 %v813, 0.0
        %v883 = vmax.f32 %v816, 0.0
        %v884 = vmax.f32 %v818, 0.0
        %v885 = vmax.f32 %v821, 0.0
        %v886 = vmax.f32 %v823, 0.0
        %v887 = vmax.f32 %v826, 0.0
        %v888 = vmax.f32 %v828, 0.0
        %v889 = vmax.f32 %v831, 0.0
        %v890 = vmax.f32 %v833, 0.0
        %v891 = vmax.f32 %v836, 0.0
        %v892 = vmax.f32 %v838, 0.0
        %v893 = vmax.f32 %v841, 0.0
        %v894 = vmax.f32 %v843, 0.0
        %v895 = vmax.f32 %v846, 0.0
        %v896 = vmax.f32 %v848, 0.0
        %v897 = vmax.f32 %v851, 0.0
        %v898 = vmax.f32 %v853, 0.0
        %v899 = vmax.f32 %v856, 0.0
        %v900 = vmax.f32 %v858, 0.0
        %v901 = vmax.f32 %v861, 0.0
        %v902 = vmax.f32 %v863, 0.0
        %v903 = vmax.f32 %v866, 0.0
        %v904 = vmax.f32 %v868, 0.0
        %v905 = vmax.f32 %v871, 0.0
        %v906 = vmax.f32 %v873, 0.0
        %v907 = vand.u32 2147483647, %v796
        %v908 = vand.u32 2147483647, %v798
        %v909 = vand.u32 2147483647, %v801
        %v910 = vand.u32 2147483647, %v803
        %v911 = vand.u32 2147483647, %v806
        %v912 = vand.u32 2147483647, %v808
        %v913 = vand.u32 2147483647, %v811
        %v914 = vand.u32 2147483647, %v813
        %v915 = vand.u32 2147483647, %v816
        %v916 = vand.u32 2147483647, %v818
        %v917 = vand.u32 2147483647, %v821
        %v918 = vand.u32 2147483647, %v823
        %v919 = vand.u32 2147483647, %v826
        %v920 = vand.u32 2147483647, %v828
        %v921 = vand.u32 2147483647, %v831
        %v922 = vand.u32 2147483647, %v833
        %v923 = vand.u32 2147483647, %v836
        %v924 = vand.u32 2147483647, %v838
        %v925 = vand.u32 2147483647, %v841
        %v926 = vand.u32 2147483647, %v843
        %v927 = vand.u32 2147483647, %v846
        %v928 = vand.u32 2147483647, %v848
        %v929 = vand.u32 2147483647, %v851
        %v930 = vand.u32 2147483647, %v853
        %v931 = vand.u32 2147483647, %v856
        %v932 = vand.u32 2147483647, %v858
        %v933 = vand.u32 2147483647, %v861
        %v934 = vand.u32 2147483647, %v863
        %v935 = vand.u32 2147483647, %v866
        %v936 = vand.u32 2147483647, %v868
        %v937 = vand.u32 2147483647, %v871
        %v938 = vand.u32 2147483647, %v873
        %v939 = vsub.f32 0.0, %v907
        %v940 = vsub.f32 0.0, %v908
        %v941 = vsub.f32 0.0, %v909
        %v942 = vsub.f32 0.0, %v910
        %v943 = vsub.f32 0.0, %v911
        %v944 = vsub.f32 0.0, %v912
        %v945 = vsub.f32 0.0, %v913
        %v946 = vsub.f32 0.0, %v914
        %v947 = vsub.f32 0.0, %v915
        %v948 = vsub.f32 0.0, %v916
        %v949 = vsub.f32 0.0, %v917
        %v950 = vsub.f32 0.0, %v918
        %v951 = vsub.f32 0.0, %v919
        %v952 = vsub.f32 0.0, %v920
        %v953 = vsub.f32 0.0, %v921
        %v954 = vsub.f32 0.0, %v922
        %v955 = vsub.f32 0.0, %v923
        %v956 = vsub.f32 0.0, %v924
        %v957 = vsub.f32 0.0, %v925
        %v958 = vsub.f32 0.0, %v926
        %v959 = vsub.f32 0.0, %v927
        %v960 = vsub.f32 0.0, %v928
        %v961 = vsub.f32 0.0, %v929
        %v962 = vsub.f32 0.0, %v930
        %v963 = vsub.f32 0.0, %v931
        %v964 = vsub.f32 0.0, %v932
        %v965 = vsub.f32 0.0, %v933
        %v966 = vsub.f32 0.0, %v934
        %v967 = vsub.f32 0.0, %v935
        %v968 = vsub.f32 0.0, %v936
        %v969 = vsub.f32 0.0, %v937
        %v970 = vsub.f32 0.0, %v938
        %v971 = vmul.f32 %v939, 1.442695
        %v972 = vpow.pop %v971
        %v973 = vmul.f32 %v940, 1.442695
        %v974 = vpow.pop %v973
        %v975 = vmul.f32 %v941, 1.442695
        %v976 = vpow.pop %v975
        %v977 = vmul.f32 %v942, 1.442695
        %v978 = vpow.pop %v977
        %v979 = vmul.f32 %v943, 1.442695
        %v980 = vpow.pop %v979
        %v981 = vmul.f32 %v944, 1.442695
        %v982 = vpow.pop %v981
        %v983 = vmul.f32 %v945, 1.442695
        %v984 = vpow.pop %v983
        %v985 = vmul.f32 %v946, 1.442695
        %v986 = vpow.pop %v985
        %v987 = vmul.f32 %v947, 1.442695
        %v988 = vpow.pop %v987
        %v989 = vmul.f32 %v948, 1.442695
        %v990 = vpow.pop %v989
        %v991 = vmul.f32 %v949, 1.442695
        %v992 = vpow.pop %v991
        %v993 = vmul.f32 %v950, 1.442695
        %v994 = vpow.pop %v993
        %v995 = vmul.f32 %v951, 1.442695
        %v996 = vpow.pop %v995
        %v997 = vmul.f32 %v952, 1.442695
        %v998 = vpow.pop %v997
        %v999 = vmul.f32 %v953, 1.442695
        %v1000 = vpow.pop %v999
        %v1001 = vmul.f32 %v954, 1.442695
        %v1002 = vpow.pop %v1001
        %v1003 = vmul.f32 %v955, 1.442695
        %v1004 = vpow.pop %v1003
        %v1005 = vmul.f32 %v956, 1.442695
        %v1006 = vpow.pop %v1005
        %v1007 = vmul.f32 %v957, 1.442695
        %v1008 = vpow.pop %v1007
        %v1009 = vmul.f32 %v958, 1.442695
        %v1010 = vpow.pop %v1009
        %v1011 = vmul.f32 %v959, 1.442695
        %v1012 = vpow.pop %v1011
        %v1013 = vmul.f32 %v960, 1.442695
        %v1014 = vpow.pop %v1013
        %v1015 = vmul.f32 %v961, 1.442695
        %v1016 = vpow.pop %v1015
        %v1017 = vmul.f32 %v962, 1.442695
        %v1018 = vpow.pop %v1017
        %v1019 = vmul.f32 %v963, 1.442695
        %v1020 = vpow.pop %v1019
        %v1021 = vmul.f32 %v964, 1.442695
        %v1022 = vpow.pop %v1021
        %v1023 = vmul.f32 %v965, 1.442695
        %v1024 = vpow.pop %v1023
        %v1025 = vmul.f32 %v966, 1.442695
        %v1026 = vpow.pop %v1025
        %v1027 = vmul.f32 %v967, 1.442695
        %v1028 = vpow.pop %v1027
        %v1029 = vmul.f32 %v968, 1.442695
        %v1030 = vpow.pop %v1029
        %v1031 = vmul.f32 %v969, 1.442695
        %v1032 = vpow.pop %v1031
        %v1033 = vmul.f32 %v970, 1.442695
        %v1034 = vpow.pop %v1033
        %v1035 = vadd.f32 %v972, 1.0
        %v1036 = vlog2.pop %v1035
        %v1037 = vmul.f32 %v1036, 0.6931472
        %v1038 = vmul.f32 -0.5, %v972
        %v1039 = vadd.f32 %v1038, 1.0
        %v1040 = vmul.f32 %v1039, %v972
        %v1041 = vand.u32 2147483647, %v972
        %vm1042 = vcmp.lt.f32.partialorder %v1041, 0.0004427343
        %v1043 = vsel %vm1042, %v1040, %v1037
        %v1044 = vadd.f32 %v974, 1.0
        %v1045 = vlog2.pop %v1044
        %v1046 = vmul.f32 %v1045, 0.6931472
        %v1047 = vmul.f32 -0.5, %v974
        %v1048 = vadd.f32 %v1047, 1.0
        %v1049 = vmul.f32 %v1048, %v974
        %v1050 = vand.u32 2147483647, %v974
        %vm1051 = vcmp.lt.f32.partialorder %v1050, 0.0004427343
        %v1052 = vsel %vm1051, %v1049, %v1046
        %v1053 = vadd.f32 %v976, 1.0
        %v1054 = vlog2.pop %v1053
        %v1055 = vmul.f32 %v1054, 0.6931472
        %v1056 = vmul.f32 -0.5, %v976
        %v1057 = vadd.f32 %v1056, 1.0
        %v1058 = vmul.f32 %v1057, %v976
        %v1059 = vand.u32 2147483647, %v976
        %vm1060 = vcmp.lt.f32.partialorder %v1059, 0.0004427343
        %v1061 = vsel %vm1060, %v1058, %v1055
        %v1062 = vadd.f32 %v978, 1.0
        %v1063 = vlog2.pop %v1062
        %v1064 = vmul.f32 %v1063, 0.6931472
        %v1065 = vmul.f32 -0.5, %v978
        %v1066 = vadd.f32 %v1065, 1.0
        %v1067 = vmul.f32 %v1066, %v978
        %v1068 = vand.u32 2147483647, %v978
        %vm1069 = vcmp.lt.f32.partialorder %v1068, 0.0004427343
        %v1070 = vsel %vm1069, %v1067, %v1064
        %v1071 = vadd.f32 %v980, 1.0
        %v1072 = vlog2.pop %v1071
        %v1073 = vmul.f32 %v1072, 0.6931472
        %v1074 = vmul.f32 -0.5, %v980
        %v1075 = vadd.f32 %v1074, 1.0
        %v1076 = vmul.f32 %v1075, %v980
        %v1077 = vand.u32 2147483647, %v980
        %vm1078 = vcmp.lt.f32.partialorder %v1077, 0.0004427343
        %v1079 = vsel %vm1078, %v1076, %v1073
        %v1080 = vadd.f32 %v982, 1.0
        %v1081 = vlog2.pop %v1080
        %v1082 = vmul.f32 %v1081, 0.6931472
        %v1083 = vmul.f32 -0.5, %v982
        %v1084 = vadd.f32 %v1083, 1.0
        %v1085 = vmul.f32 %v1084, %v982
        %v1086 = vand.u32 2147483647, %v982
        %vm1087 = vcmp.lt.f32.partialorder %v1086, 0.0004427343
        %v1088 = vsel %vm1087, %v1085, %v1082
        %v1089 = vadd.f32 %v984, 1.0
        %v1090 = vlog2.pop %v1089
        %v1091 = vmul.f32 %v1090, 0.6931472
        %v1092 = vmul.f32 -0.5, %v984
        %v1093 = vadd.f32 %v1092, 1.0
        %v1094 = vmul.f32 %v1093, %v984
        %v1095 = vand.u32 2147483647, %v984
        %vm1096 = vcmp.lt.f32.partialorder %v1095, 0.0004427343
        %v1097 = vsel %vm1096, %v1094, %v1091
        %v1098 = vadd.f32 %v986, 1.0
        %v1099 = vlog2.pop %v1098
        %v1100 = vmul.f32 %v1099, 0.6931472
        %v1101 = vmul.f32 -0.5, %v986
        %v1102 = vadd.f32 %v1101, 1.0
        %v1103 = vmul.f32 %v1102, %v986
        %v1104 = vand.u32 2147483647, %v986
        %vm1105 = vcmp.lt.f32.partialorder %v1104, 0.0004427343
        %v1106 = vsel %vm1105, %v1103, %v1100
        %v1107 = vadd.f32 %v988, 1.0
        %v1108 = vlog2.pop %v1107
        %v1109 = vmul.f32 %v1108, 0.6931472
        %v1110 = vmul.f32 -0.5, %v988
        %v1111 = vadd.f32 %v1110, 1.0
        %v1112 = vmul.f32 %v1111, %v988
        %v1113 = vand.u32 2147483647, %v988
        %vm1114 = vcmp.lt.f32.partialorder %v1113, 0.0004427343
        %v1115 = vsel %vm1114, %v1112, %v1109
        %v1116 = vadd.f32 %v990, 1.0
        %v1117 = vlog2.pop %v1116
        %v1118 = vmul.f32 %v1117, 0.6931472
        %v1119 = vmul.f32 -0.5, %v990
        %v1120 = vadd.f32 %v1119, 1.0
        %v1121 = vmul.f32 %v1120, %v990
        %v1122 = vand.u32 2147483647, %v990
        %vm1123 = vcmp.lt.f32.partialorder %v1122, 0.0004427343
        %v1124 = vsel %vm1123, %v1121, %v1118
        %v1125 = vadd.f32 %v992, 1.0
        %v1126 = vlog2.pop %v1125
        %v1127 = vmul.f32 %v1126, 0.6931472
        %v1128 = vmul.f32 -0.5, %v992
        %v1129 = vadd.f32 %v1128, 1.0
        %v1130 = vmul.f32 %v1129, %v992
        %v1131 = vand.u32 2147483647, %v992
        %vm1132 = vcmp.lt.f32.partialorder %v1131, 0.0004427343
        %v1133 = vsel %vm1132, %v1130, %v1127
        %v1134 = vadd.f32 %v994, 1.0
        %v1135 = vlog2.pop %v1134
        %v1136 = vmul.f32 %v1135, 0.6931472
        %v1137 = vmul.f32 -0.5, %v994
        %v1138 = vadd.f32 %v1137, 1.0
        %v1139 = vmul.f32 %v1138, %v994
        %v1140 = vand.u32 2147483647, %v994
        %vm1141 = vcmp.lt.f32.partialorder %v1140, 0.0004427343
        %v1142 = vsel %vm1141, %v1139, %v1136
        %v1143 = vadd.f32 %v996, 1.0
        %v1144 = vlog2.pop %v1143
        %v1145 = vmul.f32 %v1144, 0.6931472
        %v1146 = vmul.f32 -0.5, %v996
        %v1147 = vadd.f32 %v1146, 1.0
        %v1148 = vmul.f32 %v1147, %v996
        %v1149 = vand.u32 2147483647, %v996
        %vm1150 = vcmp.lt.f32.partialorder %v1149, 0.0004427343
        %v1151 = vsel %vm1150, %v1148, %v1145
        %v1152 = vadd.f32 %v998, 1.0
        %v1153 = vlog2.pop %v1152
        %v1154 = vmul.f32 %v1153, 0.6931472
        %v1155 = vmul.f32 -0.5, %v998
        %v1156 = vadd.f32 %v1155, 1.0
        %v1157 = vmul.f32 %v1156, %v998
        %v1158 = vand.u32 2147483647, %v998
        %vm1159 = vcmp.lt.f32.partialorder %v1158, 0.0004427343
        %v1160 = vsel %vm1159, %v1157, %v1154
        %v1161 = vadd.f32 %v1000, 1.0
        %v1162 = vlog2.pop %v1161
        %v1163 = vmul.f32 %v1162, 0.6931472
        %v1164 = vmul.f32 -0.5, %v1000
        %v1165 = vadd.f32 %v1164, 1.0
        %v1166 = vmul.f32 %v1165, %v1000
        %v1167 = vand.u32 2147483647, %v1000
        %vm1168 = vcmp.lt.f32.partialorder %v1167, 0.0004427343
        %v1169 = vsel %vm1168, %v1166, %v1163
        %v1170 = vadd.f32 %v1002, 1.0
        %v1171 = vlog2.pop %v1170
        %v1172 = vmul.f32 %v1171, 0.6931472
        %v1173 = vmul.f32 -0.5, %v1002
        %v1174 = vadd.f32 %v1173, 1.0
        %v1175 = vmul.f32 %v1174, %v1002
        %v1176 = vand.u32 2147483647, %v1002
        %vm1177 = vcmp.lt.f32.partialorder %v1176, 0.0004427343
        %v1178 = vsel %vm1177, %v1175, %v1172
        %v1179 = vadd.f32 %v1004, 1.0
        %v1180 = vlog2.pop %v1179
        %v1181 = vmul.f32 %v1180, 0.6931472
        %v1182 = vmul.f32 -0.5, %v1004
        %v1183 = vadd.f32 %v1182, 1.0
        %v1184 = vmul.f32 %v1183, %v1004
        %v1185 = vand.u32 2147483647, %v1004
        %vm1186 = vcmp.lt.f32.partialorder %v1185, 0.0004427343
        %v1187 = vsel %vm1186, %v1184, %v1181
        %v1188 = vadd.f32 %v1006, 1.0
        %v1189 = vlog2.pop %v1188
        %v1190 = vmul.f32 %v1189, 0.6931472
        %v1191 = vmul.f32 -0.5, %v1006
        %v1192 = vadd.f32 %v1191, 1.0
        %v1193 = vmul.f32 %v1192, %v1006
        %v1194 = vand.u32 2147483647, %v1006
        %vm1195 = vcmp.lt.f32.partialorder %v1194, 0.0004427343
        %v1196 = vsel %vm1195, %v1193, %v1190
        %v1197 = vadd.f32 %v1008, 1.0
        %v1198 = vlog2.pop %v1197
        %v1199 = vmul.f32 %v1198, 0.6931472
        %v1200 = vmul.f32 -0.5, %v1008
        %v1201 = vadd.f32 %v1200, 1.0
        %v1202 = vmul.f32 %v1201, %v1008
        %v1203 = vand.u32 2147483647, %v1008
        %vm1204 = vcmp.lt.f32.partialorder %v1203, 0.0004427343
        %v1205 = vsel %vm1204, %v1202, %v1199
        %v1206 = vadd.f32 %v1010, 1.0
        %v1207 = vlog2.pop %v1206
        %v1208 = vmul.f32 %v1207, 0.6931472
        %v1209 = vmul.f32 -0.5, %v1010
        %v1210 = vadd.f32 %v1209, 1.0
        %v1211 = vmul.f32 %v1210, %v1010
        %v1212 = vand.u32 2147483647, %v1010
        %vm1213 = vcmp.lt.f32.partialorder %v1212, 0.0004427343
        %v1214 = vsel %vm1213, %v1211, %v1208
        %v1215 = vadd.f32 %v1012, 1.0
        %v1216 = vlog2.pop %v1215
        %v1217 = vmul.f32 %v1216, 0.6931472
        %v1218 = vmul.f32 -0.5, %v1012
        %v1219 = vadd.f32 %v1218, 1.0
        %v1220 = vmul.f32 %v1219, %v1012
        %v1221 = vand.u32 2147483647, %v1012
        %vm1222 = vcmp.lt.f32.partialorder %v1221, 0.0004427343
        %v1223 = vsel %vm1222, %v1220, %v1217
        %v1224 = vadd.f32 %v1014, 1.0
        %v1225 = vlog2.pop %v1224
        %v1226 = vmul.f32 %v1225, 0.6931472
        %v1227 = vmul.f32 -0.5, %v1014
        %v1228 = vadd.f32 %v1227, 1.0
        %v1229 = vmul.f32 %v1228, %v1014
        %v1230 = vand.u32 2147483647, %v1014
        %vm1231 = vcmp.lt.f32.partialorder %v1230, 0.0004427343
        %v1232 = vsel %vm1231, %v1229, %v1226
        %v1233 = vadd.f32 %v1016, 1.0
        %v1234 = vlog2.pop %v1233
        %v1235 = vmul.f32 %v1234, 0.6931472
        %v1236 = vmul.f32 -0.5, %v1016
        %v1237 = vadd.f32 %v1236, 1.0
        %v1238 = vmul.f32 %v1237, %v1016
        %v1239 = vand.u32 2147483647, %v1016
        %vm1240 = vcmp.lt.f32.partialorder %v1239, 0.0004427343
        %v1241 = vsel %vm1240, %v1238, %v1235
        %v1242 = vadd.f32 %v1018, 1.0
        %v1243 = vlog2.pop %v1242
        %v1244 = vmul.f32 %v1243, 0.6931472
        %v1245 = vmul.f32 -0.5, %v1018
        %v1246 = vadd.f32 %v1245, 1.0
        %v1247 = vmul.f32 %v1246, %v1018
        %v1248 = vand.u32 2147483647, %v1018
        %vm1249 = vcmp.lt.f32.partialorder %v1248, 0.0004427343
        %v1250 = vsel %vm1249, %v1247, %v1244
        %v1251 = vadd.f32 %v1020, 1.0
        %v1252 = vlog2.pop %v1251
        %v1253 = vmul.f32 %v1252, 0.6931472
        %v1254 = vmul.f32 -0.5, %v1020
        %v1255 = vadd.f32 %v1254, 1.0
        %v1256 = vmul.f32 %v1255, %v1020
        %v1257 = vand.u32 2147483647, %v1020
        %vm1258 = vcmp.lt.f32.partialorder %v1257, 0.0004427343
        %v1259 = vsel %vm1258, %v1256, %v1253
        %v1260 = vadd.f32 %v1022, 1.0
        %v1261 = vlog2.pop %v1260
        %v1262 = vmul.f32 %v1261, 0.6931472
        %v1263 = vmul.f32 -0.5, %v1022
        %v1264 = vadd.f32 %v1263, 1.0
        %v1265 = vmul.f32 %v1264, %v1022
        %v1266 = vand.u32 2147483647, %v1022
        %vm1267 = vcmp.lt.f32.partialorder %v1266, 0.0004427343
        %v1268 = vsel %vm1267, %v1265, %v1262
        %v1269 = vadd.f32 %v1024, 1.0
        %v1270 = vlog2.pop %v1269
        %v1271 = vmul.f32 %v1270, 0.6931472
        %v1272 = vmul.f32 -0.5, %v1024
        %v1273 = vadd.f32 %v1272, 1.0
        %v1274 = vmul.f32 %v1273, %v1024
        %v1275 = vand.u32 2147483647, %v1024
        %vm1276 = vcmp.lt.f32.partialorder %v1275, 0.0004427343
        %v1277 = vsel %vm1276, %v1274, %v1271
        %v1278 = vadd.f32 %v1026, 1.0
        %v1279 = vlog2.pop %v1278
        %v1280 = vmul.f32 %v1279, 0.6931472
        %v1281 = vmul.f32 -0.5, %v1026
        %v1282 = vadd.f32 %v1281, 1.0
        %v1283 = vmul.f32 %v1282, %v1026
        %v1284 = vand.u32 2147483647, %v1026
        %vm1285 = vcmp.lt.f32.partialorder %v1284, 0.0004427343
        %v1286 = vsel %vm1285, %v1283, %v1280
        %v1287 = vadd.f32 %v1028, 1.0
        %v1288 = vlog2.pop %v1287
        %v1289 = vmul.f32 %v1288, 0.6931472
        %v1290 = vmul.f32 -0.5, %v1028
        %v1291 = vadd.f32 %v1290, 1.0
        %v1292 = vmul.f32 %v1291, %v1028
        %v1293 = vand.u32 2147483647, %v1028
        %vm1294 = vcmp.lt.f32.partialorder %v1293, 0.0004427343
        %v1295 = vsel %vm1294, %v1292, %v1289
        %v1296 = vadd.f32 %v1030, 1.0
        %v1297 = vlog2.pop %v1296
        %v1298 = vmul.f32 %v1297, 0.6931472
        %v1299 = vmul.f32 -0.5, %v1030
        %v1300 = vadd.f32 %v1299, 1.0
        %v1301 = vmul.f32 %v1300, %v1030
        %v1302 = vand.u32 2147483647, %v1030
        %vm1303 = vcmp.lt.f32.partialorder %v1302, 0.0004427343
        %v1304 = vsel %vm1303, %v1301, %v1298
        %v1305 = vadd.f32 %v1032, 1.0
        %v1306 = vlog2.pop %v1305
        %v1307 = vmul.f32 %v1306, 0.6931472
        %v1308 = vmul.f32 -0.5, %v1032
        %v1309 = vadd.f32 %v1308, 1.0
        %v1310 = vmul.f32 %v1309, %v1032
        %v1311 = vand.u32 2147483647, %v1032
        %vm1312 = vcmp.lt.f32.partialorder %v1311, 0.0004427343
        %v1313 = vsel %vm1312, %v1310, %v1307
        %v1314 = vadd.f32 %v1034, 1.0
        %v1315 = vlog2.pop %v1314
        %v1316 = vmul.f32 %v1315, 0.6931472
        %v1317 = vmul.f32 -0.5, %v1034
        %v1318 = vadd.f32 %v1317, 1.0
        %v1319 = vmul.f32 %v1318, %v1034
        %v1320 = vand.u32 2147483647, %v1034
        %vm1321 = vcmp.lt.f32.partialorder %v1320, 0.0004427343
        %v1322 = vsel %vm1321, %v1319, %v1316
        %v1323 = vadd.f32 %v875, %v1043
        %v1324 = vadd.f32 %v876, %v1052
        %v1325 = vadd.f32 %v877, %v1061
        %v1326 = vadd.f32 %v878, %v1070
        %v1327 = vadd.f32 %v879, %v1079
        %v1328 = vadd.f32 %v880, %v1088
        %v1329 = vadd.f32 %v881, %v1097
        %v1330 = vadd.f32 %v882, %v1106
        %v1331 = vadd.f32 %v883, %v1115
        %v1332 = vadd.f32 %v884, %v1124
        %v1333 = vadd.f32 %v885, %v1133
        %v1334 = vadd.f32 %v886, %v1142
        %v1335 = vadd.f32 %v887, %v1151
        %v1336 = vadd.f32 %v888, %v1160
        %v1337 = vadd.f32 %v889, %v1169
        %v1338 = vadd.f32 %v890, %v1178
        %v1339 = vadd.f32 %v891, %v1187
        %v1340 = vadd.f32 %v892, %v1196
        %v1341 = vadd.f32 %v893, %v1205
        %v1342 = vadd.f32 %v894, %v1214
        %v1343 = vadd.f32 %v895, %v1223
        %v1344 = vadd.f32 %v896, %v1232
        %v1345 = vadd.f32 %v897, %v1241
        %v1346 = vadd.f32 %v898, %v1250
        %v1347 = vadd.f32 %v899, %v1259
        %v1348 = vadd.f32 %v900, %v1268
        %v1349 = vadd.f32 %v901, %v1277
        %v1350 = vadd.f32 %v902, %v1286
        %v1351 = vadd.f32 %v903, %v1295
        %v1352 = vadd.f32 %v904, %v1304
        %v1353 = vadd.f32 %v905, %v1313
        %v1354 = vadd.f32 %v906, %v1322
        %v1355 = vsel %vm341, %v1323, 0.0
        %v1356 = vsel %vm342, %v1324, 0.0
        %v1357 = vsel %vm343, %v1325, 0.0
        %v1358 = vsel %vm344, %v1326, 0.0
        %v1359 = vsel %vm345, %v1327, 0.0
        %v1360 = vsel %vm346, %v1328, 0.0
        %v1361 = vsel %vm347, %v1329, 0.0
        %v1362 = vsel %vm348, %v1330, 0.0
        %v1363 = vsel %vm349, %v1331, 0.0
        %v1364 = vsel %vm350, %v1332, 0.0
        %v1365 = vsel %vm351, %v1333, 0.0
        %v1366 = vsel %vm352, %v1334, 0.0
        %v1367 = vsel %vm353, %v1335, 0.0
        %v1368 = vsel %vm354, %v1336, 0.0
        %v1369 = vsel %vm355, %v1337, 0.0
        %v1370 = vsel %vm356, %v1338, 0.0
        %v1371 = vsel %vm357, %v1339, 0.0
        %v1372 = vsel %vm358, %v1340, 0.0
        %v1373 = vsel %vm359, %v1341, 0.0
        %v1374 = vsel %vm360, %v1342, 0.0
        %v1375 = vsel %vm361, %v1343, 0.0
        %v1376 = vsel %vm362, %v1344, 0.0
        %v1377 = vsel %vm363, %v1345, 0.0
        %v1378 = vsel %vm364, %v1346, 0.0
        %v1379 = vsel %vm365, %v1347, 0.0
        %v1380 = vsel %vm366, %v1348, 0.0
        %v1381 = vsel %vm367, %v1349, 0.0
        %v1382 = vsel %vm368, %v1350, 0.0
        %v1383 = vsel %vm369, %v1351, 0.0
        %v1384 = vsel %vm370, %v1352, 0.0
        %v1385 = vsel %vm371, %v1353, 0.0
        %v1386 = vsel %vm372, %v1354, 0.0
        %1419 = vrot.lane.b32.xlu0 %v1355, 89
        %v1420 = vpop.permute.xlu0 %1419
        %1421 = vrot.lane.b32.xlu0 %v1356, 89
        %v1422 = vpop.permute.xlu0 %1421
        %1423 = vrot.lane.b32.xlu0 %v1357, 89
        %v1424 = vpop.permute.xlu0 %1423
        %1425 = vrot.lane.b32.xlu0 %v1358, 89
        %v1426 = vpop.permute.xlu0 %1425
        %1427 = vrot.lane.b32.xlu0 %v1359, 89
        %v1428 = vpop.permute.xlu0 %1427
        %1429 = vrot.lane.b32.xlu0 %v1360, 89
        %v1430 = vpop.permute.xlu0 %1429
        %1431 = vrot.lane.b32.xlu0 %v1361, 89
        %v1432 = vpop.permute.xlu0 %1431
        %1433 = vrot.lane.b32.xlu0 %v1362, 89
        %v1434 = vpop.permute.xlu0 %1433
        %1435 = vrot.lane.b32.xlu0 %v1363, 89
        %v1436 = vpop.permute.xlu0 %1435
        %1437 = vrot.lane.b32.xlu0 %v1364, 89
        %v1438 = vpop.permute.xlu0 %1437
        %1439 = vrot.lane.b32.xlu0 %v1365, 89
        %v1440 = vpop.permute.xlu0 %1439
        %1441 = vrot.lane.b32.xlu0 %v1366, 89
        %v1442 = vpop.permute.xlu0 %1441
        %1443 = vrot.lane.b32.xlu0 %v1367, 89
        %v1444 = vpop.permute.xlu0 %1443
        %1445 = vrot.lane.b32.xlu0 %v1368, 89
        %v1446 = vpop.permute.xlu0 %1445
        %1447 = vrot.lane.b32.xlu0 %v1369, 89
        %v1448 = vpop.permute.xlu0 %1447
        %1449 = vrot.lane.b32.xlu0 %v1370, 89
        %v1450 = vpop.permute.xlu0 %1449
        %1451 = vrot.lane.b32.xlu0 %v1371, 89
        %v1452 = vpop.permute.xlu0 %1451
        %1453 = vrot.lane.b32.xlu0 %v1372, 89
        %v1454 = vpop.permute.xlu0 %1453
        %1455 = vrot.lane.b32.xlu0 %v1373, 89
        %v1456 = vpop.permute.xlu0 %1455
        %1457 = vrot.lane.b32.xlu0 %v1374, 89
        %v1458 = vpop.permute.xlu0 %1457
        %1459 = vrot.lane.b32.xlu0 %v1375, 89
        %v1460 = vpop.permute.xlu0 %1459
        %1461 = vrot.lane.b32.xlu0 %v1376, 89
        %v1462 = vpop.permute.xlu0 %1461
        %1463 = vrot.lane.b32.xlu0 %v1377, 89
        %v1464 = vpop.permute.xlu0 %1463
        %1465 = vrot.lane.b32.xlu0 %v1378, 89
        %v1466 = vpop.permute.xlu0 %1465
        %1467 = vrot.lane.b32.xlu0 %v1379, 89
        %v1468 = vpop.permute.xlu0 %1467
        %1469 = vrot.lane.b32.xlu0 %v1380, 89
        %v1470 = vpop.permute.xlu0 %1469
        %1471 = vrot.lane.b32.xlu0 %v1381, 89
        %v1472 = vpop.permute.xlu0 %1471
        %1473 = vrot.lane.b32.xlu0 %v1382, 89
        %v1474 = vpop.permute.xlu0 %1473
        %1475 = vrot.lane.b32.xlu0 %v1383, 89
        %v1476 = vpop.permute.xlu0 %1475
        %1477 = vrot.lane.b32.xlu0 %v1384, 89
        %v1478 = vpop.permute.xlu0 %1477
        %1479 = vrot.lane.b32.xlu0 %v1385, 89
        %v1480 = vpop.permute.xlu0 %1479
        %1481 = vrot.lane.b32.xlu0 %v1386, 89
        %v1482 = vpop.permute.xlu0 %1481
        %vm1515 = vcmask 7168
        %v1516 = vsel %vm1515, %v1420, 0.0
        %v1517 = vsel %vm1515, %v1422, 0.0
        %v1518 = vadd.f32 %v1516, %v1517
        %v1519 = vsel %vm1515, %v1424, 0.0
        %v1520 = vadd.f32 %v1518, %v1519
        %v1521 = vsel %vm1515, %v1426, 0.0
        %v1522 = vadd.f32 %v1520, %v1521
        %v1523 = vsel %vm1515, %v1428, 0.0
        %v1524 = vadd.f32 %v1522, %v1523
        %v1525 = vsel %vm1515, %v1430, 0.0
        %v1526 = vadd.f32 %v1524, %v1525
        %v1527 = vsel %vm1515, %v1432, 0.0
        %v1528 = vadd.f32 %v1526, %v1527
        %v1529 = vsel %vm1515, %v1434, 0.0
        %v1530 = vadd.f32 %v1528, %v1529
        %v1531 = vsel %vm1515, %v1436, 0.0
        %v1532 = vadd.f32 %v1530, %v1531
        %v1533 = vsel %vm1515, %v1438, 0.0
        %v1534 = vadd.f32 %v1532, %v1533
        %v1535 = vsel %vm1515, %v1440, 0.0
        %v1536 = vadd.f32 %v1534, %v1535
        %v1537 = vsel %vm1515, %v1442, 0.0
        %v1538 = vadd.f32 %v1536, %v1537
        %v1539 = vsel %vm1515, %v1444, 0.0
        %v1540 = vadd.f32 %v1538, %v1539
        %v1541 = vsel %vm1515, %v1446, 0.0
        %v1542 = vadd.f32 %v1540, %v1541
        %v1543 = vsel %vm1515, %v1448, 0.0
        %v1544 = vadd.f32 %v1542, %v1543
        %v1545 = vsel %vm1515, %v1450, 0.0
        %v1546 = vadd.f32 %v1544, %v1545
        %v1547 = vsel %vm1515, %v1452, 0.0
        %v1548 = vadd.f32 %v1546, %v1547
        %v1549 = vsel %vm1515, %v1454, 0.0
        %v1550 = vadd.f32 %v1548, %v1549
        %v1551 = vsel %vm1515, %v1456, 0.0
        %v1552 = vadd.f32 %v1550, %v1551
        %v1553 = vsel %vm1515, %v1458, 0.0
        %v1554 = vadd.f32 %v1552, %v1553
        %v1555 = vsel %vm1515, %v1460, 0.0
        %v1556 = vadd.f32 %v1554, %v1555
        %v1557 = vsel %vm1515, %v1462, 0.0
        %v1558 = vadd.f32 %v1556, %v1557
        %v1559 = vsel %vm1515, %v1464, 0.0
        %v1560 = vadd.f32 %v1558, %v1559
        %v1561 = vsel %vm1515, %v1466, 0.0
        %v1562 = vadd.f32 %v1560, %v1561
        %v1563 = vsel %vm1515, %v1468, 0.0
        %v1564 = vadd.f32 %v1562, %v1563
        %v1565 = vsel %vm1515, %v1470, 0.0
        %v1566 = vadd.f32 %v1564, %v1565
        %v1567 = vsel %vm1515, %v1472, 0.0
        %v1568 = vadd.f32 %v1566, %v1567
        %v1569 = vsel %vm1515, %v1474, 0.0
        %v1570 = vadd.f32 %v1568, %v1569
        %v1571 = vsel %vm1515, %v1476, 0.0
        %v1572 = vadd.f32 %v1570, %v1571
        %v1573 = vsel %vm1515, %v1478, 0.0
        %v1574 = vadd.f32 %v1572, %v1573
        %v1575 = vsel %vm1515, %v1480, 0.0
        %v1576 = vadd.f32 %v1574, %v1575
        %v1577 = vsel %vm1515, %v1482, 0.0
        %v1578 = vadd.f32 %v1576, %v1577
        %1579 = vadd.xlane.f32.xlu0 %v1578
        %v1580 = vpop.xlane.xlu0 %1579
        %v1581 = vrot.slane %v1580, 4
        %v1582 = vadd.f32 %v1580, %v1581
        %v1583 = vrot.slane %v1582, 2
        %v1584 = vadd.f32 %v1582, %v1583
        %v1585 = vrot.slane %v1584, 1
        %v1586 = vadd.f32 %v1584, %v1585
        %s1587 = vtos %v1586
        %v1588 = vsub.f32 %v1323, %v796
        %v1589 = vsub.f32 %v1324, %v798
        %v1590 = vsub.f32 %v1325, %v801
        %v1591 = vsub.f32 %v1326, %v803
        %v1592 = vsub.f32 %v1327, %v806
        %v1593 = vsub.f32 %v1328, %v808
        %v1594 = vsub.f32 %v1329, %v811
        %v1595 = vsub.f32 %v1330, %v813
        %v1596 = vsub.f32 %v1331, %v816
        %v1597 = vsub.f32 %v1332, %v818
        %v1598 = vsub.f32 %v1333, %v821
        %v1599 = vsub.f32 %v1334, %v823
        %v1600 = vsub.f32 %v1335, %v826
        %v1601 = vsub.f32 %v1336, %v828
        %v1602 = vsub.f32 %v1337, %v831
        %v1603 = vsub.f32 %v1338, %v833
        %v1604 = vsub.f32 %v1339, %v836
        %v1605 = vsub.f32 %v1340, %v838
        %v1606 = vsub.f32 %v1341, %v841
        %v1607 = vsub.f32 %v1342, %v843
        %v1608 = vsub.f32 %v1343, %v846
        %v1609 = vsub.f32 %v1344, %v848
        %v1610 = vsub.f32 %v1345, %v851
        %v1611 = vsub.f32 %v1346, %v853
        %v1612 = vsub.f32 %v1347, %v856
        %v1613 = vsub.f32 %v1348, %v858
        %v1614 = vsub.f32 %v1349, %v861
        %v1615 = vsub.f32 %v1350, %v863
        %v1616 = vsub.f32 %v1351, %v866
        %v1617 = vsub.f32 %v1352, %v868
        %v1618 = vsub.f32 %v1353, %v871
        %v1619 = vsub.f32 %v1354, %v873
        %v1620 = vsel %vm341, %v1588, 0.0
        %v1621 = vsel %vm342, %v1589, 0.0
        %v1622 = vsel %vm343, %v1590, 0.0
        %v1623 = vsel %vm344, %v1591, 0.0
        %v1624 = vsel %vm345, %v1592, 0.0
        %v1625 = vsel %vm346, %v1593, 0.0
        %v1626 = vsel %vm347, %v1594, 0.0
        %v1627 = vsel %vm348, %v1595, 0.0
        %v1628 = vsel %vm349, %v1596, 0.0
        %v1629 = vsel %vm350, %v1597, 0.0
        %v1630 = vsel %vm351, %v1598, 0.0
        %v1631 = vsel %vm352, %v1599, 0.0
        %v1632 = vsel %vm353, %v1600, 0.0
        %v1633 = vsel %vm354, %v1601, 0.0
        %v1634 = vsel %vm355, %v1602, 0.0
        %v1635 = vsel %vm356, %v1603, 0.0
        %v1636 = vsel %vm357, %v1604, 0.0
        %v1637 = vsel %vm358, %v1605, 0.0
        %v1638 = vsel %vm359, %v1606, 0.0
        %v1639 = vsel %vm360, %v1607, 0.0
        %v1640 = vsel %vm361, %v1608, 0.0
        %v1641 = vsel %vm362, %v1609, 0.0
        %v1642 = vsel %vm363, %v1610, 0.0
        %v1643 = vsel %vm364, %v1611, 0.0
        %v1644 = vsel %vm365, %v1612, 0.0
        %v1645 = vsel %vm366, %v1613, 0.0
        %v1646 = vsel %vm367, %v1614, 0.0
        %v1647 = vsel %vm368, %v1615, 0.0
        %v1648 = vsel %vm369, %v1616, 0.0
        %v1649 = vsel %vm370, %v1617, 0.0
        %v1650 = vsel %vm371, %v1618, 0.0
        %v1651 = vsel %vm372, %v1619, 0.0
        %1684 = vrot.lane.b32.xlu0 %v1620, 89
        %v1685 = vpop.permute.xlu0 %1684
        %1686 = vrot.lane.b32.xlu0 %v1621, 89
        %v1687 = vpop.permute.xlu0 %1686
        %1688 = vrot.lane.b32.xlu0 %v1622, 89
        %v1689 = vpop.permute.xlu0 %1688
        %1690 = vrot.lane.b32.xlu0 %v1623, 89
        %v1691 = vpop.permute.xlu0 %1690
        %1692 = vrot.lane.b32.xlu0 %v1624, 89
        %v1693 = vpop.permute.xlu0 %1692
        %1694 = vrot.lane.b32.xlu0 %v1625, 89
        %v1695 = vpop.permute.xlu0 %1694
        %1696 = vrot.lane.b32.xlu0 %v1626, 89
        %v1697 = vpop.permute.xlu0 %1696
        %1698 = vrot.lane.b32.xlu0 %v1627, 89
        %v1699 = vpop.permute.xlu0 %1698
        %1700 = vrot.lane.b32.xlu0 %v1628, 89
        %v1701 = vpop.permute.xlu0 %1700
        %1702 = vrot.lane.b32.xlu0 %v1629, 89
        %v1703 = vpop.permute.xlu0 %1702
        %1704 = vrot.lane.b32.xlu0 %v1630, 89
        %v1705 = vpop.permute.xlu0 %1704
        %1706 = vrot.lane.b32.xlu0 %v1631, 89
        %v1707 = vpop.permute.xlu0 %1706
        %1708 = vrot.lane.b32.xlu0 %v1632, 89
        %v1709 = vpop.permute.xlu0 %1708
        %1710 = vrot.lane.b32.xlu0 %v1633, 89
        %v1711 = vpop.permute.xlu0 %1710
        %1712 = vrot.lane.b32.xlu0 %v1634, 89
        %v1713 = vpop.permute.xlu0 %1712
        %1714 = vrot.lane.b32.xlu0 %v1635, 89
        %v1715 = vpop.permute.xlu0 %1714
        %1716 = vrot.lane.b32.xlu0 %v1636, 89
        %v1717 = vpop.permute.xlu0 %1716
        %1718 = vrot.lane.b32.xlu0 %v1637, 89
        %v1719 = vpop.permute.xlu0 %1718
        %1720 = vrot.lane.b32.xlu0 %v1638, 89
        %v1721 = vpop.permute.xlu0 %1720
        %1722 = vrot.lane.b32.xlu0 %v1639, 89
        %v1723 = vpop.permute.xlu0 %1722
        %1724 = vrot.lane.b32.xlu0 %v1640, 89
        %v1725 = vpop.permute.xlu0 %1724
        %1726 = vrot.lane.b32.xlu0 %v1641, 89
        %v1727 = vpop.permute.xlu0 %1726
        %1728 = vrot.lane.b32.xlu0 %v1642, 89
        %v1729 = vpop.permute.xlu0 %1728
        %1730 = vrot.lane.b32.xlu0 %v1643, 89
        %v1731 = vpop.permute.xlu0 %1730
        %1732 = vrot.lane.b32.xlu0 %v1644, 89
        %v1733 = vpop.permute.xlu0 %1732
        %1734 = vrot.lane.b32.xlu0 %v1645, 89
        %v1735 = vpop.permute.xlu0 %1734
        %1736 = vrot.lane.b32.xlu0 %v1646, 89
        %v1737 = vpop.permute.xlu0 %1736
        %1738 = vrot.lane.b32.xlu0 %v1647, 89
        %v1739 = vpop.permute.xlu0 %1738
        %1740 = vrot.lane.b32.xlu0 %v1648, 89
        %v1741 = vpop.permute.xlu0 %1740
        %1742 = vrot.lane.b32.xlu0 %v1649, 89
        %v1743 = vpop.permute.xlu0 %1742
        %1744 = vrot.lane.b32.xlu0 %v1650, 89
        %v1745 = vpop.permute.xlu0 %1744
        %1746 = vrot.lane.b32.xlu0 %v1651, 89
        %v1747 = vpop.permute.xlu0 %1746
        %v1780 = vsel %vm1515, %v1685, 0.0
        %v1781 = vsel %vm1515, %v1687, 0.0
        %v1782 = vadd.f32 %v1780, %v1781
        %v1783 = vsel %vm1515, %v1689, 0.0
        %v1784 = vadd.f32 %v1782, %v1783
        %v1785 = vsel %vm1515, %v1691, 0.0
        %v1786 = vadd.f32 %v1784, %v1785
        %v1787 = vsel %vm1515, %v1693, 0.0
        %v1788 = vadd.f32 %v1786, %v1787
        %v1789 = vsel %vm1515, %v1695, 0.0
        %v1790 = vadd.f32 %v1788, %v1789
        %v1791 = vsel %vm1515, %v1697, 0.0
        %v1792 = vadd.f32 %v1790, %v1791
        %v1793 = vsel %vm1515, %v1699, 0.0
        %v1794 = vadd.f32 %v1792, %v1793
        %v1795 = vsel %vm1515, %v1701, 0.0
        %v1796 = vadd.f32 %v1794, %v1795
        %v1797 = vsel %vm1515, %v1703, 0.0
        %v1798 = vadd.f32 %v1796, %v1797
        %v1799 = vsel %vm1515, %v1705, 0.0
        %v1800 = vadd.f32 %v1798, %v1799
        %v1801 = vsel %vm1515, %v1707, 0.0
        %v1802 = vadd.f32 %v1800, %v1801
        %v1803 = vsel %vm1515, %v1709, 0.0
        %v1804 = vadd.f32 %v1802, %v1803
        %v1805 = vsel %vm1515, %v1711, 0.0
        %v1806 = vadd.f32 %v1804, %v1805
        %v1807 = vsel %vm1515, %v1713, 0.0
        %v1808 = vadd.f32 %v1806, %v1807
        %v1809 = vsel %vm1515, %v1715, 0.0
        %v1810 = vadd.f32 %v1808, %v1809
        %v1811 = vsel %vm1515, %v1717, 0.0
        %v1812 = vadd.f32 %v1810, %v1811
        %v1813 = vsel %vm1515, %v1719, 0.0
        %v1814 = vadd.f32 %v1812, %v1813
        %v1815 = vsel %vm1515, %v1721, 0.0
        %v1816 = vadd.f32 %v1814, %v1815
        %v1817 = vsel %vm1515, %v1723, 0.0
        %v1818 = vadd.f32 %v1816, %v1817
        %v1819 = vsel %vm1515, %v1725, 0.0
        %v1820 = vadd.f32 %v1818, %v1819
        %v1821 = vsel %vm1515, %v1727, 0.0
        %v1822 = vadd.f32 %v1820, %v1821
        %v1823 = vsel %vm1515, %v1729, 0.0
        %v1824 = vadd.f32 %v1822, %v1823
        %v1825 = vsel %vm1515, %v1731, 0.0
        %v1826 = vadd.f32 %v1824, %v1825
        %v1827 = vsel %vm1515, %v1733, 0.0
        %v1828 = vadd.f32 %v1826, %v1827
        %v1829 = vsel %vm1515, %v1735, 0.0
        %v1830 = vadd.f32 %v1828, %v1829
        %v1831 = vsel %vm1515, %v1737, 0.0
        %v1832 = vadd.f32 %v1830, %v1831
        %v1833 = vsel %vm1515, %v1739, 0.0
        %v1834 = vadd.f32 %v1832, %v1833
        %v1835 = vsel %vm1515, %v1741, 0.0
        %v1836 = vadd.f32 %v1834, %v1835
        %v1837 = vsel %vm1515, %v1743, 0.0
        %v1838 = vadd.f32 %v1836, %v1837
        %v1839 = vsel %vm1515, %v1745, 0.0
        %v1840 = vadd.f32 %v1838, %v1839
        %v1841 = vsel %vm1515, %v1747, 0.0
        %v1842 = vadd.f32 %v1840, %v1841
        %1843 = vadd.xlane.f32.xlu0 %v1842
        %v1844 = vpop.xlane.xlu0 %1843
        %v1845 = vrot.slane %v1844, 4
        %v1846 = vadd.f32 %v1844, %v1845
        %v1847 = vrot.slane %v1846, 2
        %v1848 = vadd.f32 %v1846, %v1847
        %v1849 = vrot.slane %v1848, 1
        %v1850 = vadd.f32 %v1848, %v1849
        %s1851 = vtos %v1850
        %v1852 = vmul.f32 %v796, 0.5
        %v1853 = vmul.f32 %v798, 0.5
        %v1854 = vmul.f32 %v801, 0.5
        %v1855 = vmul.f32 %v803, 0.5
        %v1856 = vmul.f32 %v806, 0.5
        %v1857 = vmul.f32 %v808, 0.5
        %v1858 = vmul.f32 %v811, 0.5
        %v1859 = vmul.f32 %v813, 0.5
        %v1860 = vmul.f32 %v816, 0.5
        %v1861 = vmul.f32 %v818, 0.5
        %v1862 = vmul.f32 %v821, 0.5
        %v1863 = vmul.f32 %v823, 0.5
        %v1864 = vmul.f32 %v826, 0.5
        %v1865 = vmul.f32 %v828, 0.5
        %v1866 = vmul.f32 %v831, 0.5
        %v1867 = vmul.f32 %v833, 0.5
        %v1868 = vmul.f32 %v836, 0.5
        %v1869 = vmul.f32 %v838, 0.5
        %v1870 = vmul.f32 %v841, 0.5
        %v1871 = vmul.f32 %v843, 0.5
        %v1872 = vmul.f32 %v846, 0.5
        %v1873 = vmul.f32 %v848, 0.5
        %v1874 = vmul.f32 %v851, 0.5
        %v1875 = vmul.f32 %v853, 0.5
        %v1876 = vmul.f32 %v856, 0.5
        %v1877 = vmul.f32 %v858, 0.5
        %v1878 = vmul.f32 %v861, 0.5
        %v1879 = vmul.f32 %v863, 0.5
        %v1880 = vmul.f32 %v866, 0.5
        %v1881 = vmul.f32 %v868, 0.5
        %v1882 = vmul.f32 %v871, 0.5
        %v1883 = vmul.f32 %v873, 0.5
        %v1884 = vtanh.pop %v1852
        %v1885 = vtanh.pop %v1853
        %v1886 = vtanh.pop %v1854
        %v1887 = vtanh.pop %v1855
        %v1888 = vtanh.pop %v1856
        %v1889 = vtanh.pop %v1857
        %v1890 = vtanh.pop %v1858
        %v1891 = vtanh.pop %v1859
        %v1892 = vtanh.pop %v1860
        %v1893 = vtanh.pop %v1861
        %v1894 = vtanh.pop %v1862
        %v1895 = vtanh.pop %v1863
        %v1896 = vtanh.pop %v1864
        %v1897 = vtanh.pop %v1865
        %v1898 = vtanh.pop %v1866
        %v1899 = vtanh.pop %v1867
        %v1900 = vtanh.pop %v1868
        %v1901 = vtanh.pop %v1869
        %v1902 = vtanh.pop %v1870
        %v1903 = vtanh.pop %v1871
        %v1904 = vtanh.pop %v1872
        %v1905 = vtanh.pop %v1873
        %v1906 = vtanh.pop %v1874
        %v1907 = vtanh.pop %v1875
        %v1908 = vtanh.pop %v1876
        %v1909 = vtanh.pop %v1877
        %v1910 = vtanh.pop %v1878
        %v1911 = vtanh.pop %v1879
        %v1912 = vtanh.pop %v1880
        %v1913 = vtanh.pop %v1881
        %v1914 = vtanh.pop %v1882
        %v1915 = vtanh.pop %v1883
        %v1916 = vmul.f32 %v1884, 0.5
        %v1917 = vmul.f32 %v1885, 0.5
        %v1918 = vmul.f32 %v1886, 0.5
        %v1919 = vmul.f32 %v1887, 0.5
        %v1920 = vmul.f32 %v1888, 0.5
        %v1921 = vmul.f32 %v1889, 0.5
        %v1922 = vmul.f32 %v1890, 0.5
        %v1923 = vmul.f32 %v1891, 0.5
        %v1924 = vmul.f32 %v1892, 0.5
        %v1925 = vmul.f32 %v1893, 0.5
        %v1926 = vmul.f32 %v1894, 0.5
        %v1927 = vmul.f32 %v1895, 0.5
        %v1928 = vmul.f32 %v1896, 0.5
        %v1929 = vmul.f32 %v1897, 0.5
        %v1930 = vmul.f32 %v1898, 0.5
        %v1931 = vmul.f32 %v1899, 0.5
        %v1932 = vmul.f32 %v1900, 0.5
        %v1933 = vmul.f32 %v1901, 0.5
        %v1934 = vmul.f32 %v1902, 0.5
        %v1935 = vmul.f32 %v1903, 0.5
        %v1936 = vmul.f32 %v1904, 0.5
        %v1937 = vmul.f32 %v1905, 0.5
        %v1938 = vmul.f32 %v1906, 0.5
        %v1939 = vmul.f32 %v1907, 0.5
        %v1940 = vmul.f32 %v1908, 0.5
        %v1941 = vmul.f32 %v1909, 0.5
        %v1942 = vmul.f32 %v1910, 0.5
        %v1943 = vmul.f32 %v1911, 0.5
        %v1944 = vmul.f32 %v1912, 0.5
        %v1945 = vmul.f32 %v1913, 0.5
        %v1946 = vmul.f32 %v1914, 0.5
        %v1947 = vmul.f32 %v1915, 0.5
        %v1948 = vadd.f32 %v1916, 0.5
        %v1949 = vadd.f32 %v1917, 0.5
        %v1950 = vadd.f32 %v1918, 0.5
        %v1951 = vadd.f32 %v1919, 0.5
        %v1952 = vadd.f32 %v1920, 0.5
        %v1953 = vadd.f32 %v1921, 0.5
        %v1954 = vadd.f32 %v1922, 0.5
        %v1955 = vadd.f32 %v1923, 0.5
        %v1956 = vadd.f32 %v1924, 0.5
        %v1957 = vadd.f32 %v1925, 0.5
        %v1958 = vadd.f32 %v1926, 0.5
        %v1959 = vadd.f32 %v1927, 0.5
        %v1960 = vadd.f32 %v1928, 0.5
        %v1961 = vadd.f32 %v1929, 0.5
        %v1962 = vadd.f32 %v1930, 0.5
        %v1963 = vadd.f32 %v1931, 0.5
        %v1964 = vadd.f32 %v1932, 0.5
        %v1965 = vadd.f32 %v1933, 0.5
        %v1966 = vadd.f32 %v1934, 0.5
        %v1967 = vadd.f32 %v1935, 0.5
        %v1968 = vadd.f32 %v1936, 0.5
        %v1969 = vadd.f32 %v1937, 0.5
        %v1970 = vadd.f32 %v1938, 0.5
        %v1971 = vadd.f32 %v1939, 0.5
        %v1972 = vadd.f32 %v1940, 0.5
        %v1973 = vadd.f32 %v1941, 0.5
        %v1974 = vadd.f32 %v1942, 0.5
        %v1975 = vadd.f32 %v1943, 0.5
        %v1976 = vadd.f32 %v1944, 0.5
        %v1977 = vadd.f32 %v1945, 0.5
        %v1978 = vadd.f32 %v1946, 0.5
        %v1979 = vadd.f32 %v1947, 0.5
        %v1980 = vld [vmem:[%s268] sm:$0xf]
        %v1981 = vld [vmem:[%s268 + $0x4] sm:$0xf]
        %v1982 = vld [vmem:[%s268 + $0x8] sm:$0xf]
        %v1983 = vld [vmem:[%s268 + $0xc] sm:$0xf]
        %v1984 = vld [vmem:[%s268 + $0x10] sm:$0xf]
        %v1985 = vld [vmem:[%s268 + $0x14] sm:$0xf]
        %v1986 = vld [vmem:[%s268 + $0x18] sm:$0xf]
        %v1987 = vld [vmem:[%s268 + $0x1c] sm:$0xf]
        %v1988 = vld [vmem:[%s268 + $0x20] sm:$0xf]
        %v1989 = vld [vmem:[%s268 + $0x24] sm:$0xf]
        %v1990 = vld [vmem:[%s268 + $0x28] sm:$0xf]
        %v1991 = vld [vmem:[%s268 + $0x2c] sm:$0xf]
        %v1992 = vld [vmem:[%s268 + $0x30] sm:$0xf]
        %v1993 = vld [vmem:[%s268 + $0x34] sm:$0xf]
        %v1994 = vld [vmem:[%s268 + $0x38] sm:$0xf]
        %v1995 = vld [vmem:[%s268 + $0x3c] sm:$0xf]
        %v1996 = vld [vmem:[%s268 + $0x40] sm:$0xf]
        %v1997 = vld [vmem:[%s268 + $0x44] sm:$0xf]
        %v1998 = vld [vmem:[%s268 + $0x48] sm:$0xf]
        %v1999 = vld [vmem:[%s268 + $0x4c] sm:$0xf]
        %v2000 = vld [vmem:[%s268 + $0x50] sm:$0xf]
        %v2001 = vld [vmem:[%s268 + $0x54] sm:$0xf]
        %v2002 = vld [vmem:[%s268 + $0x58] sm:$0xf]
        %v2003 = vld [vmem:[%s268 + $0x5c] sm:$0xf]
        %v2004 = vld [vmem:[%s268 + $0x60] sm:$0xf]
        %v2005 = vld [vmem:[%s268 + $0x64] sm:$0xf]
        %v2006 = vld [vmem:[%s268 + $0x68] sm:$0xf]
        %v2007 = vld [vmem:[%s268 + $0x6c] sm:$0xf]
        %v2008 = vld [vmem:[%s268 + $0x70] sm:$0xf]
        %v2009 = vld [vmem:[%s268 + $0x74] sm:$0xf]
        %v2010 = vld [vmem:[%s268 + $0x78] sm:$0xf]
        %v2011 = vld [vmem:[%s268 + $0x7c] sm:$0xf]
        %v2012 = vunpack.c.l.bf16 %v1980
        %v2013 = vunpack.c.l.bf16 %v1981
        %v2014 = vunpack.c.l.bf16 %v1982
        %v2015 = vunpack.c.l.bf16 %v1983
        %v2016 = vunpack.c.l.bf16 %v1984
        %v2017 = vunpack.c.l.bf16 %v1985
        %v2018 = vunpack.c.l.bf16 %v1986
        %v2019 = vunpack.c.l.bf16 %v1987
        %v2020 = vunpack.c.l.bf16 %v1988
        %v2021 = vunpack.c.l.bf16 %v1989
        %v2022 = vunpack.c.l.bf16 %v1990
        %v2023 = vunpack.c.l.bf16 %v1991
        %v2024 = vunpack.c.l.bf16 %v1992
        %v2025 = vunpack.c.l.bf16 %v1993
        %v2026 = vunpack.c.l.bf16 %v1994
        %v2027 = vunpack.c.l.bf16 %v1995
        %v2028 = vunpack.c.l.bf16 %v1996
        %v2029 = vunpack.c.l.bf16 %v1997
        %v2030 = vunpack.c.l.bf16 %v1998
        %v2031 = vunpack.c.l.bf16 %v1999
        %v2032 = vunpack.c.l.bf16 %v2000
        %v2033 = vunpack.c.l.bf16 %v2001
        %v2034 = vunpack.c.l.bf16 %v2002
        %v2035 = vunpack.c.l.bf16 %v2003
        %v2036 = vunpack.c.l.bf16 %v2004
        %v2037 = vunpack.c.l.bf16 %v2005
        %v2038 = vunpack.c.l.bf16 %v2006
        %v2039 = vunpack.c.l.bf16 %v2007
        %v2040 = vunpack.c.l.bf16 %v2008
        %v2041 = vunpack.c.l.bf16 %v2009
        %v2042 = vunpack.c.l.bf16 %v2010
        %v2043 = vunpack.c.l.bf16 %v2011
        %v2044 = vsub.f32 %v1948, %v2012
        %v2045 = vsub.f32 %v1949, %v2013
        %v2046 = vsub.f32 %v1950, %v2014
        %v2047 = vsub.f32 %v1951, %v2015
        %v2048 = vsub.f32 %v1952, %v2016
        %v2049 = vsub.f32 %v1953, %v2017
        %v2050 = vsub.f32 %v1954, %v2018
        %v2051 = vsub.f32 %v1955, %v2019
        %v2052 = vsub.f32 %v1956, %v2020
        %v2053 = vsub.f32 %v1957, %v2021
        %v2054 = vsub.f32 %v1958, %v2022
        %v2055 = vsub.f32 %v1959, %v2023
        %v2056 = vsub.f32 %v1960, %v2024
        %v2057 = vsub.f32 %v1961, %v2025
        %v2058 = vsub.f32 %v1962, %v2026
        %v2059 = vsub.f32 %v1963, %v2027
        %v2060 = vsub.f32 %v1964, %v2028
        %v2061 = vsub.f32 %v1965, %v2029
        %v2062 = vsub.f32 %v1966, %v2030
        %v2063 = vsub.f32 %v1967, %v2031
        %v2064 = vsub.f32 %v1968, %v2032
        %v2065 = vsub.f32 %v1969, %v2033
        %v2066 = vsub.f32 %v1970, %v2034
        %v2067 = vsub.f32 %v1971, %v2035
        %v2068 = vsub.f32 %v1972, %v2036
        %v2069 = vsub.f32 %v1973, %v2037
        %v2070 = vsub.f32 %v1974, %v2038
        %v2071 = vsub.f32 %v1975, %v2039
        %v2072 = vsub.f32 %v1976, %v2040
        %v2073 = vsub.f32 %v1977, %v2041
        %v2074 = vsub.f32 %v1978, %v2042
        %v2075 = vsub.f32 %v1979, %v2043
        %v2076 = vmul.f32 %v2044, %v2044
        %v2077 = vmul.f32 %v2045, %v2045
        %v2078 = vmul.f32 %v2046, %v2046
        %v2079 = vmul.f32 %v2047, %v2047
        %v2080 = vmul.f32 %v2048, %v2048
        %v2081 = vmul.f32 %v2049, %v2049
        %v2082 = vmul.f32 %v2050, %v2050
        %v2083 = vmul.f32 %v2051, %v2051
        %v2084 = vmul.f32 %v2052, %v2052
        %v2085 = vmul.f32 %v2053, %v2053
        %v2086 = vmul.f32 %v2054, %v2054
        %v2087 = vmul.f32 %v2055, %v2055
        %v2088 = vmul.f32 %v2056, %v2056
        %v2089 = vmul.f32 %v2057, %v2057
        %v2090 = vmul.f32 %v2058, %v2058
        %v2091 = vmul.f32 %v2059, %v2059
        %v2092 = vmul.f32 %v2060, %v2060
        %v2093 = vmul.f32 %v2061, %v2061
        %v2094 = vmul.f32 %v2062, %v2062
        %v2095 = vmul.f32 %v2063, %v2063
        %v2096 = vmul.f32 %v2064, %v2064
        %v2097 = vmul.f32 %v2065, %v2065
        %v2098 = vmul.f32 %v2066, %v2066
        %v2099 = vmul.f32 %v2067, %v2067
        %v2100 = vmul.f32 %v2068, %v2068
        %v2101 = vmul.f32 %v2069, %v2069
        %v2102 = vmul.f32 %v2070, %v2070
        %v2103 = vmul.f32 %v2071, %v2071
        %v2104 = vmul.f32 %v2072, %v2072
        %v2105 = vmul.f32 %v2073, %v2073
        %v2106 = vmul.f32 %v2074, %v2074
        %v2107 = vmul.f32 %v2075, %v2075
        %vm2108 = vcmask 318464
        %v2109 = vsel %vm2108, %v2076, 0.0
        %2110 = vadd.xlane.f32.xlu0 %v2109
        %v2111 = vpop.xlane.xlu0 %2110
        %v2112 = vsel %vm2108, %v2077, 0.0
        %2113 = vadd.xlane.f32.xlu0 %v2112
        %v2114 = vpop.xlane.xlu0 %2113
        %v2115 = vsel %vm2108, %v2078, 0.0
        %2116 = vadd.xlane.f32.xlu0 %v2115
        %v2117 = vpop.xlane.xlu0 %2116
        %v2118 = vsel %vm2108, %v2079, 0.0
        %2119 = vadd.xlane.f32.xlu0 %v2118
        %v2120 = vpop.xlane.xlu0 %2119
        %v2121 = vsel %vm2108, %v2080, 0.0
        %2122 = vadd.xlane.f32.xlu0 %v2121
        %v2123 = vpop.xlane.xlu0 %2122
        %v2124 = vsel %vm2108, %v2081, 0.0
        %2125 = vadd.xlane.f32.xlu0 %v2124
        %v2126 = vpop.xlane.xlu0 %2125
        %v2127 = vsel %vm2108, %v2082, 0.0
        %2128 = vadd.xlane.f32.xlu0 %v2127
        %v2129 = vpop.xlane.xlu0 %2128
        %v2130 = vsel %vm2108, %v2083, 0.0
        %2131 = vadd.xlane.f32.xlu0 %v2130
        %v2132 = vpop.xlane.xlu0 %2131
        %v2133 = vsel %vm2108, %v2084, 0.0
        %2134 = vadd.xlane.f32.xlu0 %v2133
        %v2135 = vpop.xlane.xlu0 %2134
        %v2136 = vsel %vm2108, %v2085, 0.0
        %2137 = vadd.xlane.f32.xlu0 %v2136
        %v2138 = vpop.xlane.xlu0 %2137
        %v2139 = vsel %vm2108, %v2086, 0.0
        %2140 = vadd.xlane.f32.xlu0 %v2139
        %v2141 = vpop.xlane.xlu0 %2140
        %v2142 = vsel %vm2108, %v2087, 0.0
        %2143 = vadd.xlane.f32.xlu0 %v2142
        %v2144 = vpop.xlane.xlu0 %2143
        %v2145 = vsel %vm2108, %v2088, 0.0
        %2146 = vadd.xlane.f32.xlu0 %v2145
        %v2147 = vpop.xlane.xlu0 %2146
        %v2148 = vsel %vm2108, %v2089, 0.0
        %2149 = vadd.xlane.f32.xlu0 %v2148
        %v2150 = vpop.xlane.xlu0 %2149
        %v2151 = vsel %vm2108, %v2090, 0.0
        %2152 = vadd.xlane.f32.xlu0 %v2151
        %v2153 = vpop.xlane.xlu0 %2152
        %v2154 = vsel %vm2108, %v2091, 0.0
        %2155 = vadd.xlane.f32.xlu0 %v2154
        %v2156 = vpop.xlane.xlu0 %2155
        %v2157 = vsel %vm2108, %v2092, 0.0
        %2158 = vadd.xlane.f32.xlu0 %v2157
        %v2159 = vpop.xlane.xlu0 %2158
        %v2160 = vsel %vm2108, %v2093, 0.0
        %2161 = vadd.xlane.f32.xlu0 %v2160
        %v2162 = vpop.xlane.xlu0 %2161
        %v2163 = vsel %vm2108, %v2094, 0.0
        %2164 = vadd.xlane.f32.xlu0 %v2163
        %v2165 = vpop.xlane.xlu0 %2164
        %v2166 = vsel %vm2108, %v2095, 0.0
        %2167 = vadd.xlane.f32.xlu0 %v2166
        %v2168 = vpop.xlane.xlu0 %2167
        %v2169 = vsel %vm2108, %v2096, 0.0
        %2170 = vadd.xlane.f32.xlu0 %v2169
        %v2171 = vpop.xlane.xlu0 %2170
        %v2172 = vsel %vm2108, %v2097, 0.0
        %2173 = vadd.xlane.f32.xlu0 %v2172
        %v2174 = vpop.xlane.xlu0 %2173
        %v2175 = vsel %vm2108, %v2098, 0.0
        %2176 = vadd.xlane.f32.xlu0 %v2175
        %v2177 = vpop.xlane.xlu0 %2176
        %v2178 = vsel %vm2108, %v2099, 0.0
        %2179 = vadd.xlane.f32.xlu0 %v2178
        %v2180 = vpop.xlane.xlu0 %2179
        %v2181 = vsel %vm2108, %v2100, 0.0
        %2182 = vadd.xlane.f32.xlu0 %v2181
        %v2183 = vpop.xlane.xlu0 %2182
        %v2184 = vsel %vm2108, %v2101, 0.0
        %2185 = vadd.xlane.f32.xlu0 %v2184
        %v2186 = vpop.xlane.xlu0 %2185
        %v2187 = vsel %vm2108, %v2102, 0.0
        %2188 = vadd.xlane.f32.xlu0 %v2187
        %v2189 = vpop.xlane.xlu0 %2188
        %v2190 = vsel %vm2108, %v2103, 0.0
        %2191 = vadd.xlane.f32.xlu0 %v2190
        %v2192 = vpop.xlane.xlu0 %2191
        %v2193 = vsel %vm2108, %v2104, 0.0
        %2194 = vadd.xlane.f32.xlu0 %v2193
        %v2195 = vpop.xlane.xlu0 %2194
        %v2196 = vsel %vm2108, %v2105, 0.0
        %2197 = vadd.xlane.f32.xlu0 %v2196
        %v2198 = vpop.xlane.xlu0 %2197
        %v2199 = vsel %vm2108, %v2106, 0.0
        %2200 = vadd.xlane.f32.xlu0 %v2199
        %v2201 = vpop.xlane.xlu0 %2200
        %v2202 = vsel %vm2108, %v2107, 0.0
        %2203 = vadd.xlane.f32.xlu0 %v2202
        %v2204 = vpop.xlane.xlu0 %2203
        %v2205 = vsel %vm341, %v2111, 0.0
        %v2206 = vsel %vm342, %v2114, 0.0
        %v2207 = vsel %vm343, %v2117, 0.0
        %v2208 = vsel %vm344, %v2120, 0.0
        %v2209 = vsel %vm345, %v2123, 0.0
        %v2210 = vsel %vm346, %v2126, 0.0
        %v2211 = vsel %vm347, %v2129, 0.0
        %v2212 = vsel %vm348, %v2132, 0.0
        %v2213 = vsel %vm349, %v2135, 0.0
        %v2214 = vsel %vm350, %v2138, 0.0
        %v2215 = vsel %vm351, %v2141, 0.0
        %v2216 = vsel %vm352, %v2144, 0.0
        %v2217 = vsel %vm353, %v2147, 0.0
        %v2218 = vsel %vm354, %v2150, 0.0
        %v2219 = vsel %vm355, %v2153, 0.0
        %v2220 = vsel %vm356, %v2156, 0.0
        %v2221 = vsel %vm357, %v2159, 0.0
        %v2222 = vsel %vm358, %v2162, 0.0
        %v2223 = vsel %vm359, %v2165, 0.0
        %v2224 = vsel %vm360, %v2168, 0.0
        %v2225 = vsel %vm361, %v2171, 0.0
        %v2226 = vsel %vm362, %v2174, 0.0
        %v2227 = vsel %vm363, %v2177, 0.0
        %v2228 = vsel %vm364, %v2180, 0.0
        %v2229 = vsel %vm365, %v2183, 0.0
        %v2230 = vsel %vm366, %v2186, 0.0
        %v2231 = vsel %vm367, %v2189, 0.0
        %v2232 = vsel %vm368, %v2192, 0.0
        %v2233 = vsel %vm369, %v2195, 0.0
        %v2234 = vsel %vm370, %v2198, 0.0
        %v2235 = vsel %vm371, %v2201, 0.0
        %v2236 = vsel %vm372, %v2204, 0.0
        %v2237 = vsel %vm1515, %v2205, 0.0
        %v2238 = vsel %vm1515, %v2206, 0.0
        %v2239 = vadd.f32 %v2237, %v2238
        %v2240 = vsel %vm1515, %v2207, 0.0
        %v2241 = vadd.f32 %v2239, %v2240
        %v2242 = vsel %vm1515, %v2208, 0.0
        %v2243 = vadd.f32 %v2241, %v2242
        %v2244 = vsel %vm1515, %v2209, 0.0
        %v2245 = vadd.f32 %v2243, %v2244
        %v2246 = vsel %vm1515, %v2210, 0.0
        %v2247 = vadd.f32 %v2245, %v2246
        %v2248 = vsel %vm1515, %v2211, 0.0
        %v2249 = vadd.f32 %v2247, %v2248
        %v2250 = vsel %vm1515, %v2212, 0.0
        %v2251 = vadd.f32 %v2249, %v2250
        %v2252 = vsel %vm1515, %v2213, 0.0
        %v2253 = vadd.f32 %v2251, %v2252
        %v2254 = vsel %vm1515, %v2214, 0.0
        %v2255 = vadd.f32 %v2253, %v2254
        %v2256 = vsel %vm1515, %v2215, 0.0
        %v2257 = vadd.f32 %v2255, %v2256
        %v2258 = vsel %vm1515, %v2216, 0.0
        %v2259 = vadd.f32 %v2257, %v2258
        %v2260 = vsel %vm1515, %v2217, 0.0
        %v2261 = vadd.f32 %v2259, %v2260
        %v2262 = vsel %vm1515, %v2218, 0.0
        %v2263 = vadd.f32 %v2261, %v2262
        %v2264 = vsel %vm1515, %v2219, 0.0
        %v2265 = vadd.f32 %v2263, %v2264
        %v2266 = vsel %vm1515, %v2220, 0.0
        %v2267 = vadd.f32 %v2265, %v2266
        %v2268 = vsel %vm1515, %v2221, 0.0
        %v2269 = vadd.f32 %v2267, %v2268
        %v2270 = vsel %vm1515, %v2222, 0.0
        %v2271 = vadd.f32 %v2269, %v2270
        %v2272 = vsel %vm1515, %v2223, 0.0
        %v2273 = vadd.f32 %v2271, %v2272
        %v2274 = vsel %vm1515, %v2224, 0.0
        %v2275 = vadd.f32 %v2273, %v2274
        %v2276 = vsel %vm1515, %v2225, 0.0
        %v2277 = vadd.f32 %v2275, %v2276
        %v2278 = vsel %vm1515, %v2226, 0.0
        %v2279 = vadd.f32 %v2277, %v2278
        %v2280 = vsel %vm1515, %v2227, 0.0
        %v2281 = vadd.f32 %v2279, %v2280
        %v2282 = vsel %vm1515, %v2228, 0.0
        %v2283 = vadd.f32 %v2281, %v2282
        %v2284 = vsel %vm1515, %v2229, 0.0
        %v2285 = vadd.f32 %v2283, %v2284
        %v2286 = vsel %vm1515, %v2230, 0.0
        %v2287 = vadd.f32 %v2285, %v2286
        %v2288 = vsel %vm1515, %v2231, 0.0
        %v2289 = vadd.f32 %v2287, %v2288
        %v2290 = vsel %vm1515, %v2232, 0.0
        %v2291 = vadd.f32 %v2289, %v2290
        %v2292 = vsel %vm1515, %v2233, 0.0
        %v2293 = vadd.f32 %v2291, %v2292
        %v2294 = vsel %vm1515, %v2234, 0.0
        %v2295 = vadd.f32 %v2293, %v2294
        %v2296 = vsel %vm1515, %v2235, 0.0
        %v2297 = vadd.f32 %v2295, %v2296
        %v2298 = vsel %vm1515, %v2236, 0.0
        %v2299 = vadd.f32 %v2297, %v2298
        %2300 = vadd.xlane.f32.xlu0 %v2299
        %v2301 = vpop.xlane.xlu0 %2300
        %v2302 = vrot.slane %v2301, 4
        %v2303 = vadd.f32 %v2301, %v2302
        %v2304 = vrot.slane %v2303, 2
        %v2305 = vadd.f32 %v2303, %v2304
        %v2306 = vrot.slane %v2305, 1
        %v2307 = vadd.f32 %v2305, %v2306
        %s2308 = vtos %v2307
        %v2309 = vlaneseq
        %v2310 = vand.u32 %v2309, 127
        %vm2311 = vcmp.eq.s32.totalorder %v2310, 0
        %v2312 = vstv %s1851
        %v2313 = vsel %vm2311, %v2312, 0.0
        %vm2314 = vcmp.eq.s32.totalorder %v2310, 1
        %v2315 = vstv %s1587
        %v2316 = vsel %vm2314, %v2315, 0.0
        %v2317 = vadd.f32 %v2313, %v2316
        %vm2318 = vcmp.eq.s32.totalorder %v2310, 2
        %v2319 = vstv %s2308
        %v2320 = vsel %vm2318, %v2319, 0.0
        %v2321 = vadd.f32 %v2317, %v2320
        %2322 = vst [vmem:[%s253] sm:$0x1] %v2321
        %s2323 = sand.u32 %s123, 1
        %s2324 = scalar_lea.sflag [#allocation4], %s2323
        %s2325 = sand.u32 %s123, 1
        %s2326 = scalar_lea.vmem [#allocation5], %s2325
        // Predicated region
        $region41: #{tpu_custom_call.1} parent=35 // pred_check
          %p2327 = pneg %p133
        $region42: #{tpu_custom_call.1} parent=35 // pred_check_branch
          %2329 = sbr.rel (%p2327) target = $region44
        $region43: #{tpu_custom_call.1} parent=35 // pred_region
          %2331 = vsyncadd %s2324, 0
          %s2332 = scalar_lea.hbm %s4, %s21
          %s2334 = sshll.u32 %s2326, 4
          %s2335 = int_to_ptr.vmem [resolvable:$true] %s2334
          %s2336 = sshll.u32 %s2332, 4
          %s2337 = int_to_ptr.hbm [resolvable:$true] %s2336
          %2339 = dma.vmem_to_hbm [thread:$0]  %s2335, 16, %s2337, %s2324
        $region44: #{tpu_custom_call.1} parent=35 // pred_fallthru
          _
      $region36: #{tpu_custom_call.1} parent=5 // pred_fallthru
        _
      %p2340 = scmp.le.s32.totalorder 2, %s16
      // Predicated region
      $region45: #{tpu_custom_call.1} parent=5 // pred_check
        %p2341 = pneg %p2340
      $region46: #{tpu_custom_call.1} parent=5 // pred_check_branch
        %2343 = sbr.rel (%p2341) target = $region48
      $region47: #{tpu_custom_call.1} parent=5 // pred_region
        %s2344 = ssub.s32 %s16, 2
        // Predicated region
        $region49: #{tpu_custom_call.1} parent=47 // pred_check
          %p2345 = pneg %p139
        $region50: #{tpu_custom_call.1} parent=47 // pred_check_branch
          %2347 = sbr.rel (%p2345) target = $region52
        $region51: #{tpu_custom_call.1} parent=47 // pred_region
          %s2348 = sand.u32 %s124, 1
          %s2349 = scalar_lea.sflag [#allocation4], %s2348
          %s2350 = sand.u32 %s124, 1
          %s2351 = scalar_lea.vmem [#allocation5], %s2350
          %2353 = dma.done %s2349, 16
        $region52: #{tpu_custom_call.1} parent=47 // pred_fallthru
          _
      $region48: #{tpu_custom_call.1} parent=5 // pred_fallthru
        _
    $region6: #{tpu_custom_call.1} parent=1 // loop_footer
      %s20 = sadd.s32 1, %s16
    $region7: #{tpu_custom_call.1} parent=1 // loop_footer_branch
      %15 = sbr.rel target = $region3
    $region8: #{tpu_custom_call.1} parent=1 // loop_exit
      _
    %2354 = vsyncpa [#allocation3], 1
    %s2355 = scalar_lea.sflag [#allocation3], 1
    %2356 = vsyncpa %s2355, 1
    %2357 = vsyncpa [#allocation4], 1
    %s2358 = scalar_lea.sflag [#allocation4], 1
    %2359 = vsyncpa %s2358, 1

</llo_original>
